<compile_context>
chip_gen: v5e
topology: v5e:2x2
jax: 0.10.0
libtpu: 0.0.40
codegen_flags: <defaults>
</compile_context>

<pallas_src>
import jax
import jax.numpy as jnp
from jax.experimental import pallas as pl
from jax.experimental.pallas import tpu as pltpu


# --------------------------------------------------------------------------- #
# Kernel: fused 3x3 'same' conv + pixel_shuffle for one row tile.
#   xm_ref : (TH, W+2, Cin)     padded-input rows [m*TH, m*TH+TH)
#   ha_ref : (1,  W+2, Cin)     halo row  m*TH+TH
#   hb_ref : (1,  W+2, Cin)     halo row  m*TH+TH+1
#   w_ref  : (3, 3*Cin, r*r*C)  per-dh weights; K ordered (dw, cin), cols (i,j,c)
#   b_ref  : (1, r*r*C)         bias ordered (i, j, c), fp32
#   o_ref  : (TH, r, W, r*C)    pixel-shuffled output block
# --------------------------------------------------------------------------- #
def _conv3x3_ps_kernel(xm_ref, ha_ref, hb_ref, w_ref, b_ref, o_ref):
    th, r, w, rc = o_ref.shape
    cin = xm_ref.shape[-1]
    nout = r * rc

    # Assemble the (TH+2, W+2, Cin) halo tile in VMEM (no HBM duplication).
    xt = jnp.concatenate([xm_ref[...], ha_ref[...], hb_ref[...]], axis=0)

    acc = jnp.zeros((th * w, nout), jnp.float32)
    for dh in range(3):        # unrolled: 3 MXU matmuls, K = 3*Cin, fp32 accum
        lhs = jnp.concatenate(
            [xt[dh:dh + th, dw:dw + w, :] for dw in range(3)], axis=-1)
        acc = acc + jnp.dot(lhs.reshape(th * w, 3 * cin), w_ref[dh],
                            preferred_element_type=jnp.float32)
    acc = acc + b_ref[...]                     # (1, nout) broadcasts over rows

    # Finish pixel_shuffle: sub-row i gets columns [i*r*C, (i+1)*r*C).
    for i in range(r):
        o_ref[:, i, :, :] = (
            acc[:, i * rc:(i + 1) * rc].reshape(th, w, rc).astype(o_ref.dtype))


def _pick_row_tile(h, w, cin, nout, in_bytes, out_bytes, vmem_budget):
    """Largest TH dividing h whose estimated VMEM footprint fits the budget."""
    def est(th):
        tm = th * w
        b = 2 * th * (w + 2) * cin * in_bytes        # main input block, 2 bufs
        b += 2 * 2 * (w + 2) * cin * in_bytes        # halo rows, 2 bufs
        b += 2 * tm * nout * out_bytes               # output block, 2 bufs
        b += 9 * cin * nout * in_bytes               # resident weights
        b += (th + 2) * (w + 2) * cin * in_bytes     # assembled halo tile
        b += tm * 3 * cin * in_bytes                 # per-dh lhs
        b += 2 * tm * nout * 4                       # fp32 acc + headroom
        return b
    best = 1
    for th in range(1, h + 1):
        if h % th == 0 and est(th) <= vmem_budget:
            best = th
    return best


def conv3x3_pixel_shuffle_nhwc(x, weight, bias, r, *,
                               compute_dtype=jnp.bfloat16,
                               out_dtype=None,
                               vmem_budget_bytes=20 * 1024 * 1024):
    """3x3 'same' conv (torch OIHW weights) + pixel_shuffle(r), NHWC in/out.

    x: (N, H, W, Cin); weight: (C*r*r, Cin, 3, 3); bias: (C*r*r,)
    returns (N, H*r, W*r, C).
    """
    n, h, w, cin = x.shape
    cout = weight.shape[0]
    c = cout // (r * r)
    assert c * r * r == cout and weight.shape[1] == cin
    nout = r * r * c
    rc = r * c
    cdt = jnp.dtype(x.dtype if compute_dtype is None else compute_dtype)
    odt = jnp.dtype(x.dtype if out_dtype is None else out_dtype)

    # One fused cast + spatial zero-pad pass; NO im2col materialization.
    xp = jnp.pad(x.astype(cdt), ((0, 0), (1, 1), (1, 1), (0, 0)))

    # Weights -> (dh, (dw, cin), (i, j, c)); bias -> (1, (i, j, c)) in fp32.
    w_k = jnp.transpose(weight.reshape(c, r, r, cin, 3, 3),
                        (4, 5, 3, 1, 2, 0)).reshape(3, 3 * cin, nout).astype(cdt)
    b_k = jnp.transpose(bias.reshape(c, r, r),
                        (1, 2, 0)).reshape(1, nout).astype(jnp.float32)

    th = _pick_row_tile(h, w, cin, nout, cdt.itemsize, odt.itemsize,
                        vmem_budget_bytes)
    grid = (n, h // th)

    flops = 2 * n * h * w * 9 * cin * nout
    bytes_accessed = int(xp.size * cdt.itemsize
                         + n * h * w * nout * odt.itemsize
                         + w_k.size * cdt.itemsize + b_k.size * 4)

    out = pl.pallas_call(
        _conv3x3_ps_kernel,
        out_shape=jax.ShapeDtypeStruct((n, h, r, w, rc), odt),
        grid_spec=pltpu.PrefetchScalarGridSpec(
            num_scalar_prefetch=0,
            grid=grid,
            in_specs=[
                # Main row tile: padded rows [m*TH, m*TH + TH).
                pl.BlockSpec((None, th, w + 2, cin),
                             lambda b, m: (b, m, 0, 0)),
                # 2-row halo: padded rows m*TH+TH and m*TH+TH+1 (same array,
                # 1-row blocks -> block index == row index).
                pl.BlockSpec((None, 1, w + 2, cin),
                             lambda b, m: (b, (m + 1) * th, 0, 0)),
                pl.BlockSpec((None, 1, w + 2, cin),
                             lambda b, m: (b, (m + 1) * th + 1, 0, 0)),
                # Weights / bias: constant index_map -> DMA'd into VMEM once.
                pl.BlockSpec((3, 3 * cin, nout), lambda b, m: (0, 0, 0)),
                pl.BlockSpec((1, nout), lambda b, m: (0, 0)),
            ],
            out_specs=pl.BlockSpec((None, th, r, w, rc),
                                   lambda b, m: (b, m, 0, 0, 0)),
        ),
        compiler_params=pltpu.CompilerParams(
            dimension_semantics=("parallel", "parallel"),
            vmem_limit_bytes=48 * 1024 * 1024),
        cost_estimate=pl.CostEstimate(flops=flops, transcendentals=0,
                                      bytes_accessed=bytes_accessed),
    )(xp, xp, xp, w_k, b_k)

    # (N, H, r, W, r*C) == (N, H*r, W*r, C): pure contiguous reshape — the
    # pixel_shuffle interleave already happened inside the kernel's stores.
    return out.reshape(n, h * r, w * r, c)


def sr_upsampling(x, params, factor=2, compute_dtype=jnp.bfloat16):
    """Forward of SR_upsampling: conv3x3 + pixel_shuffle (twice if factor==4).
    x is NCHW (PyTorch layout); internally NHWC end-to-end."""
    f = 2 if factor == 4 else factor
    y = jnp.transpose(x, (0, 2, 3, 1))                     # NCHW -> NHWC (once)
    if factor == 4:
        # Intermediate kept in the compute dtype: stage 2's MXU consumes it at
        # that precision anyway, so this only halves its HBM traffic.
        y = conv3x3_pixel_shuffle_nhwc(y, params["w1"], params["b1"], f,
                                       compute_dtype=compute_dtype,
                                       out_dtype=compute_dtype)
        y = conv3x3_pixel_shuffle_nhwc(y, params["w2"], params["b2"], f,
                                       compute_dtype=compute_dtype,
                                       out_dtype=x.dtype)
    else:
        y = conv3x3_pixel_shuffle_nhwc(y, params["w1"], params["b1"], f,
                                       compute_dtype=compute_dtype,
                                       out_dtype=x.dtype)
    # TODO(synk): drop this transpose (full HBM pass over the largest tensor)
    # if the downstream consumer can take NHWC directly.
    return jnp.transpose(y, (0, 3, 1, 2))                  # NHWC -> NCHW (once)


sr_upsampling_jit = jax.jit(sr_upsampling,
                            static_argnames=("factor", "compute_dtype"))


# --------------------------------------------------------------------------- #
# Pure-JAX reference (correctness check only).
# --------------------------------------------------------------------------- #
def pixel_shuffle_nchw(x, r):
    n, crr, h, w = x.shape
    c = crr // (r * r)
    x = x.reshape(n, c, r, r, h, w)
    x = jnp.transpose(x, (0, 1, 4, 2, 5, 3))
    return x.reshape(n, c, h * r, w * r)


def _conv_ref(x, w, b):
    y = jax.lax.conv_general_dilated(
        x, w, window_strides=(1, 1), padding="SAME",
        dimension_numbers=("NCHW", "OIHW", "NCHW"))
    return y + b[None, :, None, None]


def _ref_forward(x, params, factor=2):
    f = 2 if factor == 4 else factor
    y = pixel_shuffle_nchw(_conv_ref(x, params["w1"], params["b1"]), f)
    if factor == 4:
        y = pixel_shuffle_nchw(_conv_ref(y, params["w2"], params["b2"]), f)
    return y


if __name__ == "__main__":
    key = jax.random.PRNGKey(0)
    N, C, H, W = 2, 4, 16, 16          # batch=2, num_filters=4, spatial=16
    k_x, k_w1, k_b1, k_w2, k_b2 = jax.random.split(key, 5)

    x = jax.random.normal(k_x, (N, C, H, W), jnp.float32)

    f = 2
    params2 = {
        "w1": jax.random.normal(k_w1, (C * f * f, C, 3, 3), jnp.float32) * 0.1,
        "b1": jax.random.normal(k_b1, (C * f * f,), jnp.float32) * 0.1,
    }
    params4 = {
        "w1": params2["w1"], "b1": params2["b1"],
        "w2": jax.random.normal(k_w2, (C * f * f, C, 3, 3), jnp.float32) * 0.1,
        "b2": jax.random.normal(k_b2, (C * f * f,), jnp.float32) * 0.1,
    }

    ref2 = _ref_forward(x, params2, factor=2)
    ref4 = _ref_forward(x, params4, factor=4)

    # ---- fp32 compute path: tight check against lax.conv reference ----
    out2 = sr_upsampling_jit(x, params2, factor=2, compute_dtype=jnp.float32)
    jax.block_until_ready(out2)
    assert out2.shape == (N, C, H * 2, W * 2), out2.shape
    assert jnp.allclose(out2, ref2, atol=1e-4, rtol=1e-4)

    out4 = sr_upsampling_jit(x, params4, factor=4, compute_dtype=jnp.float32)
    jax.block_until_ready(out4)
    assert out4.shape == (N, C, H * 4, W * 4), out4.shape
    assert jnp.allclose(out4, ref4, atol=1e-4, rtol=1e-4)

    # ---- default path: bf16 MXU inputs, fp32 accumulation ----
    out2_bf16 = sr_upsampling_jit(x, params2, factor=2)
    jax.block_until_ready(out2_bf16)
    assert out2_bf16.shape == (N, C, H * 2, W * 2)
    assert jnp.allclose(out2_bf16, ref2, atol=5e-2, rtol=5e-2)

    out4_bf16 = sr_upsampling_jit(x, params4, factor=4)
    jax.block_until_ready(out4_bf16)
    assert out4_bf16.shape == (N, C, H * 4, W * 4)

    print("KERNEL_OK")
</pallas_src>

<mosaic_0001>
module attributes {stable_mosaic.version = 11 : i64} {
  func.func @_conv3x3_ps_kernel(%arg0: i32, %arg1: i32, %arg2: memref<1x16x18x4xf32, #tpu.memory_space<vmem>>, %arg3: memref<1x1x18x4xf32, #tpu.memory_space<vmem>>, %arg4: memref<1x1x18x4xf32, #tpu.memory_space<vmem>>, %arg5: memref<3x12x16xf32, #tpu.memory_space<vmem>>, %arg6: memref<1x16xf32, #tpu.memory_space<vmem>>, %arg7: memref<1x16x2x16x8xf32, #tpu.memory_space<vmem>>) attributes {dimension_semantics = [#tpu.dimension_semantics<parallel>, #tpu.dimension_semantics<parallel>], iteration_bounds = array<i64: 2, 1>, scalar_prefetch = 0 : i64, scratch_operands = 0 : i64, tpu.core_type = #tpu.core_type<tc>, window_params = [{transform_indices = @transform_0, window_bounds = array<i64: 1, 16, 18, 4>}, {transform_indices = @transform_1, window_bounds = array<i64: 1, 1, 18, 4>}, {transform_indices = @transform_2, window_bounds = array<i64: 1, 1, 18, 4>}, {pipeline_mode = #tpu.pipeline_mode<synchronous>, transform_indices = @transform_3, window_bounds = array<i64: 3, 12, 16>}, {pipeline_mode = #tpu.pipeline_mode<synchronous>, transform_indices = @transform_4, window_bounds = array<i64: 1, 16>}, {transform_indices = @transform_5, window_bounds = array<i64: 1, 16, 2, 16, 8>}]} {
    %c0 = arith.constant 0 : index
    %c0_0 = arith.constant 0 : index
    %c0_1 = arith.constant 0 : index
    %c0_2 = arith.constant 0 : index
    %0 = vector.load %arg2[%c0, %c0_0, %c0_1, %c0_2] : memref<1x16x18x4xf32, #tpu.memory_space<vmem>>, vector<1x16x18x4xf32>
    %1 = vector.shape_cast %0 : vector<1x16x18x4xf32> to vector<16x18x4xf32>
    %c0_3 = arith.constant 0 : index
    %c0_4 = arith.constant 0 : index
    %c0_5 = arith.constant 0 : index
    %c0_6 = arith.constant 0 : index
    %2 = vector.load %arg3[%c0_3, %c0_4, %c0_5, %c0_6] : memref<1x1x18x4xf32, #tpu.memory_space<vmem>>, vector<1x1x18x4xf32>
    %3 = vector.shape_cast %2 : vector<1x1x18x4xf32> to vector<1x18x4xf32>
    %c0_7 = arith.constant 0 : index
    %c0_8 = arith.constant 0 : index
    %c0_9 = arith.constant 0 : index
    %c0_10 = arith.constant 0 : index
    %4 = vector.load %arg4[%c0_7, %c0_8, %c0_9, %c0_10] : memref<1x1x18x4xf32, #tpu.memory_space<vmem>>, vector<1x1x18x4xf32>
    %5 = vector.shape_cast %4 : vector<1x1x18x4xf32> to vector<1x18x4xf32>
    %6 = tpu.concatenate %1, %3, %5 in 0 : vector<16x18x4xf32>, vector<1x18x4xf32>, vector<1x18x4xf32> -> vector<18x18x4xf32>
    %cst = arith.constant 0.000000e+00 : f32
    %7 = vector.broadcast %cst : f32 to vector<256x16xf32>
    %8 = vector.extract_strided_slice %6 {offsets = [0, 0, 0], sizes = [16, 16, 4], strides = [1, 1, 1]} : vector<18x18x4xf32> to vector<16x16x4xf32>
    %9 = vector.extract_strided_slice %6 {offsets = [0, 1, 0], sizes = [16, 16, 4], strides = [1, 1, 1]} : vector<18x18x4xf32> to vector<16x16x4xf32>
    %10 = vector.extract_strided_slice %6 {offsets = [0, 2, 0], sizes = [16, 16, 4], strides = [1, 1, 1]} : vector<18x18x4xf32> to vector<16x16x4xf32>
    %11 = tpu.concatenate %8, %9, %10 in 2 : vector<16x16x4xf32>, vector<16x16x4xf32>, vector<16x16x4xf32> -> vector<16x16x12xf32>
    %12 = vector.shape_cast %11 : vector<16x16x12xf32> to vector<256x12xf32>
    %c0_11 = arith.constant 0 : index
    %c0_12 = arith.constant 0 : index
    %c0_13 = arith.constant 0 : index
    %13 = vector.load %arg5[%c0_11, %c0_12, %c0_13] : memref<3x12x16xf32, #tpu.memory_space<vmem>>, vector<1x12x16xf32>
    %14 = vector.shape_cast %13 : vector<1x12x16xf32> to vector<12x16xf32>
    %cst_14 = arith.constant dense<0.000000e+00> : vector<256x16xf32>
    %15 = tpu.matmul %12, %14, %cst_14 {dimension_numbers = #tpu.dot_dimension_numbers<[1], [0], [0], [1], [0, 0, 1, 1], [], []>} : vector<256x12xf32>, vector<12x16xf32>, vector<256x16xf32> -> vector<256x16xf32>
    %16 = arith.addf %7, %15 : vector<256x16xf32>
    %17 = vector.extract_strided_slice %6 {offsets = [1, 0, 0], sizes = [16, 16, 4], strides = [1, 1, 1]} : vector<18x18x4xf32> to vector<16x16x4xf32>
    %18 = vector.extract_strided_slice %6 {offsets = [1, 1, 0], sizes = [16, 16, 4], strides = [1, 1, 1]} : vector<18x18x4xf32> to vector<16x16x4xf32>
    %19 = vector.extract_strided_slice %6 {offsets = [1, 2, 0], sizes = [16, 16, 4], strides = [1, 1, 1]} : vector<18x18x4xf32> to vector<16x16x4xf32>
    %20 = tpu.concatenate %17, %18, %19 in 2 : vector<16x16x4xf32>, vector<16x16x4xf32>, vector<16x16x4xf32> -> vector<16x16x12xf32>
    %21 = vector.shape_cast %20 : vector<16x16x12xf32> to vector<256x12xf32>
    %c1 = arith.constant 1 : index
    %c0_15 = arith.constant 0 : index
    %c0_16 = arith.constant 0 : index
    %22 = vector.load %arg5[%c1, %c0_15, %c0_16] : memref<3x12x16xf32, #tpu.memory_space<vmem>>, vector<1x12x16xf32>
    %23 = vector.shape_cast %22 : vector<1x12x16xf32> to vector<12x16xf32>
    %cst_17 = arith.constant dense<0.000000e+00> : vector<256x16xf32>
    %24 = tpu.matmul %21, %23, %cst_17 {dimension_numbers = #tpu.dot_dimension_numbers<[1], [0], [0], [1], [0, 0, 1, 1], [], []>} : vector<256x12xf32>, vector<12x16xf32>, vector<256x16xf32> -> vector<256x16xf32>
    %25 = arith.addf %16, %24 : vector<256x16xf32>
    %26 = vector.extract_strided_slice %6 {offsets = [2, 0, 0], sizes = [16, 16, 4], strides = [1, 1, 1]} : vector<18x18x4xf32> to vector<16x16x4xf32>
    %27 = vector.extract_strided_slice %6 {offsets = [2, 1, 0], sizes = [16, 16, 4], strides = [1, 1, 1]} : vector<18x18x4xf32> to vector<16x16x4xf32>
    %28 = vector.extract_strided_slice %6 {offsets = [2, 2, 0], sizes = [16, 16, 4], strides = [1, 1, 1]} : vector<18x18x4xf32> to vector<16x16x4xf32>
    %29 = tpu.concatenate %26, %27, %28 in 2 : vector<16x16x4xf32>, vector<16x16x4xf32>, vector<16x16x4xf32> -> vector<16x16x12xf32>
    %30 = vector.shape_cast %29 : vector<16x16x12xf32> to vector<256x12xf32>
    %c2 = arith.constant 2 : index
    %c0_18 = arith.constant 0 : index
    %c0_19 = arith.constant 0 : index
    %31 = vector.load %arg5[%c2, %c0_18, %c0_19] : memref<3x12x16xf32, #tpu.memory_space<vmem>>, vector<1x12x16xf32>
    %32 = vector.shape_cast %31 : vector<1x12x16xf32> to vector<12x16xf32>
    %cst_20 = arith.constant dense<0.000000e+00> : vector<256x16xf32>
    %33 = tpu.matmul %30, %32, %cst_20 {dimension_numbers = #tpu.dot_dimension_numbers<[1], [0], [0], [1], [0, 0, 1, 1], [], []>} : vector<256x12xf32>, vector<12x16xf32>, vector<256x16xf32> -> vector<256x16xf32>
    %34 = arith.addf %25, %33 : vector<256x16xf32>
    %c0_21 = arith.constant 0 : index
    %c0_22 = arith.constant 0 : index
    %35 = vector.load %arg6[%c0_21, %c0_22] : memref<1x16xf32, #tpu.memory_space<vmem>>, vector<1x16xf32>
    %36 = vector.broadcast %35 : vector<1x16xf32> to vector<256x16xf32>
    %37 = arith.addf %34, %36 : vector<256x16xf32>
    %38 = vector.extract_strided_slice %37 {offsets = [0, 0], sizes = [256, 8], strides = [1, 1]} : vector<256x16xf32> to vector<256x8xf32>
    %39 = vector.shape_cast %38 : vector<256x8xf32> to vector<16x16x8xf32>
    %c0_23 = arith.constant 0 : index
    %c0_24 = arith.constant 0 : index
    %c0_25 = arith.constant 0 : index
    %c0_26 = arith.constant 0 : index
    %c0_27 = arith.constant 0 : index
    %40 = vector.load %arg7[%c0_23, %c0_24, %c0_25, %c0_26, %c0_27] : memref<1x16x2x16x8xf32, #tpu.memory_space<vmem>>, vector<1x16x1x16x8xf32>
    %41 = vector.shape_cast %40 : vector<1x16x1x16x8xf32> to vector<16x16x8xf32>
    %42 = vector.shape_cast %39 : vector<16x16x8xf32> to vector<1x16x1x16x8xf32>
    tpu.vector_store %arg7[%c0_23, %c0_24, %c0_25, %c0_26, %c0_27], %42 {strides = array<i32>} : memref<1x16x2x16x8xf32, #tpu.memory_space<vmem>>, vector<1x16x1x16x8xf32>,
    %43 = vector.extract_strided_slice %37 {offsets = [0, 8], sizes = [256, 8], strides = [1, 1]} : vector<256x16xf32> to vector<256x8xf32>
    %44 = vector.shape_cast %43 : vector<256x8xf32> to vector<16x16x8xf32>
    %c0_28 = arith.constant 0 : index
    %c0_29 = arith.constant 0 : index
    %c1_30 = arith.constant 1 : index
    %c0_31 = arith.constant 0 : index
    %c0_32 = arith.constant 0 : index
    %45 = vector.load %arg7[%c0_28, %c0_29, %c1_30, %c0_31, %c0_32] : memref<1x16x2x16x8xf32, #tpu.memory_space<vmem>>, vector<1x16x1x16x8xf32>
    %46 = vector.shape_cast %45 : vector<1x16x1x16x8xf32> to vector<16x16x8xf32>
    %47 = vector.shape_cast %44 : vector<16x16x8xf32> to vector<1x16x1x16x8xf32>
    tpu.vector_store %arg7[%c0_28, %c0_29, %c1_30, %c0_31, %c0_32], %47 {strides = array<i32>} : memref<1x16x2x16x8xf32, #tpu.memory_space<vmem>>, vector<1x16x1x16x8xf32>,
    return
  }
  func.func @transform_0(%arg0: i32, %arg1: i32) -> (i32, i32, i32, i32) {
    %c0_i32 = arith.constant 0 : i32
    %c0_i32_0 = arith.constant 0 : i32
    %c0_i32_1 = arith.constant 0 : i32
    return %arg0, %arg1, %c0_i32, %c0_i32_0 : i32, i32, i32, i32
  }
  func.func @transform_1(%arg0: i32, %arg1: i32) -> (i32, i32, i32, i32) {
    %c1_i32 = arith.constant 1 : i32
    %0 = arith.addi %arg1, %c1_i32 : i32
    %c16_i32 = arith.constant 16 : i32
    %1 = arith.muli %0, %c16_i32 : i32
    %c0_i32 = arith.constant 0 : i32
    %c0_i32_0 = arith.constant 0 : i32
    %c0_i32_1 = arith.constant 0 : i32
    return %arg0, %1, %c0_i32, %c0_i32_0 : i32, i32, i32, i32
  }
  func.func @transform_2(%arg0: i32, %arg1: i32) -> (i32, i32, i32, i32) {
    %c1_i32 = arith.constant 1 : i32
    %0 = arith.addi %arg1, %c1_i32 : i32
    %c16_i32 = arith.constant 16 : i32
    %1 = arith.muli %0, %c16_i32 : i32
    %c1_i32_0 = arith.constant 1 : i32
    %2 = arith.addi %1, %c1_i32_0 : i32
    %c0_i32 = arith.constant 0 : i32
    %c0_i32_1 = arith.constant 0 : i32
    %c0_i32_2 = arith.constant 0 : i32
    return %arg0, %2, %c0_i32, %c0_i32_1 : i32, i32, i32, i32
  }
  func.func @transform_3(%arg0: i32, %arg1: i32) -> (i32, i32, i32) {
    %c0_i32 = arith.constant 0 : i32
    %c0_i32_0 = arith.constant 0 : i32
    %c0_i32_1 = arith.constant 0 : i32
    %c0_i32_2 = arith.constant 0 : i32
    return %c0_i32, %c0_i32_0, %c0_i32_1 : i32, i32, i32
  }
  func.func @transform_4(%arg0: i32, %arg1: i32) -> (i32, i32) {
    %c0_i32 = arith.constant 0 : i32
    %c0_i32_0 = arith.constant 0 : i32
    %c0_i32_1 = arith.constant 0 : i32
    return %c0_i32, %c0_i32_0 : i32, i32
  }
  func.func @transform_5(%arg0: i32, %arg1: i32) -> (i32, i32, i32, i32, i32) {
    %c0_i32 = arith.constant 0 : i32
    %c0_i32_0 = arith.constant 0 : i32
    %c0_i32_1 = arith.constant 0 : i32
    %c0_i32_2 = arith.constant 0 : i32
    return %arg0, %arg1, %c0_i32, %c0_i32_0, %c0_i32_1 : i32, i32, i32, i32, i32
  }
}

</mosaic_0001>

<llo_original>
// kernel: sr_upsampling.1
$region0: #{sr_upsampling.1}
  #allocation0 [shape = 'u32[]', space=smem, size = 0x4, offset = 0x4, fixed_abs, tag = 'smem constant byte address 0x4 - core index']
  #allocation1 [shape = 'u32[72,128]{1,0:T(1,128)}', space=vmem, size = 0x9000, scoped, tag = 'internal scratch']
  %s0 = inlined_call_operand.vmem [shape: f32[2,18,18,4], index: 0, kind: input, shape index: {}, may-alias: {0,1,2}]
  %s1 = inlined_call_operand.vmem [shape: f32[2,18,18,4], index: 1, kind: input, shape index: {}, may-alias: {0,1,2}]
  %s2 = inlined_call_operand.vmem [shape: f32[2,18,18,4], index: 2, kind: input, shape index: {}, may-alias: {0,1,2}]
  %s3 = inlined_call_operand.vmem [shape: f32[3,12,16], index: 3, kind: input, shape index: {}]
  %s4 = inlined_call_operand.vmem [shape: f32[1,16], index: 4, kind: input, shape index: {}]
  %s5 = inlined_call_operand.vmem [shape: f32[2,16,2,16,8], index: 5, kind: output, shape index: {}]
  %s6 = sld [smem:[#allocation0]]
  $region53: #{sr_upsampling.1} parent=0
    _
  %s8 = ssub.s32 1, %s6
  %s9 = scalar_select 0, %s8, %s6
  loop: start=0, step=1, limit=4
  $region2: #{sr_upsampling.1} parent=0 // loop_pre_header
    _
  $region3: #{sr_upsampling.1} parent=0 // loop_header
    %s11 = sphi 0, %s15
    %p12 = scmp.ge.s32.totalorder %s11, 4
    %s18 = sphi 0, %s30
    %s19 = sphi 0, %s26
    %s20 = sphi 0, %s18
    %s21 = sphi 0, %s19
    %s22 = sphi 0, %s20
    %s23 = sphi 0, %s21
    %s35 = sphi 0, %s37
    %s38 = sphi 0, %s35
    %s39 = sphi 0, %s38
    %s55 = sphi 0, %s39
    %s67 = sphi 0, %s69
    %s70 = sphi 0, %s67
    %s71 = sphi 0, %s70
    %s87 = sphi 0, %s71
    %s101 = sphi 0, %s103
    %s104 = sphi 0, %s101
    %s105 = sphi 0, %s104
    %s121 = sphi 0, %s105
    %s125 = sphi 0, %s125
    %s127 = sphi 0, %s125
    %s128 = sphi 0, %s127
    %s142 = sphi 0, %s128
    %s146 = sphi 0, %s146
    %s148 = sphi 0, %s146
    %s149 = sphi 0, %s148
    %s163 = sphi 0, %s149
    %s171 = sphi 0, %s173
    %s174 = sphi 0, %s171
    %s175 = sphi 0, %s174
    %s191 = sphi 0, %s175
  $region4: #{sr_upsampling.1} parent=0 // loop_header_branch
    %14 = sbr.rel (%p12) target = $region8
  $region5: #{sr_upsampling.1} parent=0 // loop_body
    %s16 = ssub.s32 %s11, 1
    %s17 = ssub.s32 %s11, 2
    %s24 = sadd.s32 1, %s19
    %p25 = scmp.ge.s32.totalorder %s24, 1
    %s26 = scalar_select %p25, 0, %s24
    %s27 = sadd.s32 1, %s18
    %s28 = scalar_select %p25, %s27, %s18
    %p29 = scmp.ge.s32.totalorder %s28, 2
    %s30 = scalar_select %p29, 0, %s28
    %s31 = ssub.s32 %s18, %s30
    %s32 = ssub.s32 %s19, %s26
    %s33 = sor.u32 %s31, %s32
    %p34 = scmp.eq.s32.totalorder %s33, 0
    %s36 = sadd.s32 %s35, 1
    %s37 = scalar_select %p34, %s35, %s36
    %p40 = pneg %p34
    %p41 = scmp.eq.s32.totalorder %s11, 1
    %p42 = por %p40, %p41
    %p43 = scmp.ne.s32.totalorder %s35, %s38
    %p44 = scmp.eq.s32.totalorder %s11, 0
    %p45 = por %p43, %p44
    %p46 = scmp.ne.s32.totalorder %s35, %s38
    %p47 = scmp.eq.s32.totalorder %s16, 1
    %p48 = por %p46, %p47
    %p49 = scmp.ne.s32.totalorder %s38, %s39
    %p50 = scmp.eq.s32.totalorder %s16, 0
    %p51 = por %p49, %p50
    %p52 = scmp.ne.s32.totalorder %s38, %s39
    %p53 = scmp.eq.s32.totalorder %s17, 1
    %p54 = por %p52, %p53
    %p56 = scmp.ne.s32.totalorder %s39, %s55
    %p57 = scmp.eq.s32.totalorder %s17, 0
    %p58 = por %p56, %p57
    %s59 = sadd.s32 %s19, 1
    %s60 = smul.u32 %s59, 16
    %s61 = sadd.s32 %s26, 1
    %s62 = smul.u32 %s61, 16
    %s63 = ssub.s32 %s18, %s30
    %s64 = ssub.s32 %s60, %s62
    %s65 = sor.u32 %s63, %s64
    %p66 = scmp.eq.s32.totalorder %s65, 0
    %s68 = sadd.s32 %s67, 1
    %s69 = scalar_select %p66, %s67, %s68
    %p72 = pneg %p66
    %p73 = scmp.eq.s32.totalorder %s11, 1
    %p74 = por %p72, %p73
    %p75 = scmp.ne.s32.totalorder %s67, %s70
    %p76 = scmp.eq.s32.totalorder %s11, 0
    %p77 = por %p75, %p76
    %p78 = scmp.ne.s32.totalorder %s67, %s70
    %p79 = scmp.eq.s32.totalorder %s16, 1
    %p80 = por %p78, %p79
    %p81 = scmp.ne.s32.totalorder %s70, %s71
    %p82 = scmp.eq.s32.totalorder %s16, 0
    %p83 = por %p81, %p82
    %p84 = scmp.ne.s32.totalorder %s70, %s71
    %p85 = scmp.eq.s32.totalorder %s17, 1
    %p86 = por %p84, %p85
    %p88 = scmp.ne.s32.totalorder %s71, %s87
    %p89 = scmp.eq.s32.totalorder %s17, 0
    %p90 = por %p88, %p89
    %s91 = sadd.s32 %s19, 1
    %s92 = smul.u32 %s91, 16
    %s93 = sadd.s32 %s92, 1
    %s94 = sadd.s32 %s26, 1
    %s95 = smul.u32 %s94, 16
    %s96 = sadd.s32 %s95, 1
    %s97 = ssub.s32 %s18, %s30
    %s98 = ssub.s32 %s93, %s96
    %s99 = sor.u32 %s97, %s98
    %p100 = scmp.eq.s32.totalorder %s99, 0
    %s102 = sadd.s32 %s101, 1
    %s103 = scalar_select %p100, %s101, %s102
    %p106 = pneg %p100
    %p107 = scmp.eq.s32.totalorder %s11, 1
    %p108 = por %p106, %p107
    %p109 = scmp.ne.s32.totalorder %s101, %s104
    %p110 = scmp.eq.s32.totalorder %s11, 0
    %p111 = por %p109, %p110
    %p112 = scmp.ne.s32.totalorder %s101, %s104
    %p113 = scmp.eq.s32.totalorder %s16, 1
    %p114 = por %p112, %p113
    %p115 = scmp.ne.s32.totalorder %s104, %s105
    %p116 = scmp.eq.s32.totalorder %s16, 0
    %p117 = por %p115, %p116
    %p118 = scmp.ne.s32.totalorder %s104, %s105
    %p119 = scmp.eq.s32.totalorder %s17, 1
    %p120 = por %p118, %p119
    %p122 = scmp.ne.s32.totalorder %s105, %s121
    %p123 = scmp.eq.s32.totalorder %s17, 0
    %p124 = por %p122, %p123
    %s126 = sadd.s32 %s125, 1
    %p129 = scmp.eq.s32.totalorder %s11, 1
    %p130 = scmp.ne.s32.totalorder %s125, %s127
    %p131 = scmp.eq.s32.totalorder %s11, 0
    %p132 = por %p130, %p131
    %p133 = scmp.ne.s32.totalorder %s125, %s127
    %p134 = scmp.eq.s32.totalorder %s16, 1
    %p135 = por %p133, %p134
    %p136 = scmp.ne.s32.totalorder %s127, %s128
    %p137 = scmp.eq.s32.totalorder %s16, 0
    %p138 = por %p136, %p137
    %p139 = scmp.ne.s32.totalorder %s127, %s128
    %p140 = scmp.eq.s32.totalorder %s17, 1
    %p141 = por %p139, %p140
    %p143 = scmp.ne.s32.totalorder %s128, %s142
    %p144 = scmp.eq.s32.totalorder %s17, 0
    %p145 = por %p143, %p144
    %s147 = sadd.s32 %s146, 1
    %p150 = scmp.eq.s32.totalorder %s11, 1
    %p151 = scmp.ne.s32.totalorder %s146, %s148
    %p152 = scmp.eq.s32.totalorder %s11, 0
    %p153 = por %p151, %p152
    %p154 = scmp.ne.s32.totalorder %s146, %s148
    %p155 = scmp.eq.s32.totalorder %s16, 1
    %p156 = por %p154, %p155
    %p157 = scmp.ne.s32.totalorder %s148, %s149
    %p158 = scmp.eq.s32.totalorder %s16, 0
    %p159 = por %p157, %p158
    %p160 = scmp.ne.s32.totalorder %s148, %s149
    %p161 = scmp.eq.s32.totalorder %s17, 1
    %p162 = por %p160, %p161
    %p164 = scmp.ne.s32.totalorder %s149, %s163
    %p165 = scmp.eq.s32.totalorder %s17, 0
    %p166 = por %p164, %p165
    %s167 = ssub.s32 %s18, %s30
    %s168 = ssub.s32 %s19, %s26
    %s169 = sor.u32 %s167, %s168
    %p170 = scmp.eq.s32.totalorder %s169, 0
    %s172 = sadd.s32 %s171, 1
    %s173 = scalar_select %p170, %s171, %s172
    %p176 = pneg %p170
    %p177 = scmp.eq.s32.totalorder %s11, 1
    %p178 = por %p176, %p177
    %p179 = scmp.ne.s32.totalorder %s171, %s174
    %p180 = scmp.eq.s32.totalorder %s11, 0
    %p181 = por %p179, %p180
    %p182 = scmp.ne.s32.totalorder %s171, %s174
    %p183 = scmp.eq.s32.totalorder %s16, 1
    %p184 = por %p182, %p183
    %p185 = scmp.ne.s32.totalorder %s174, %s175
    %p186 = scmp.eq.s32.totalorder %s16, 0
    %p187 = por %p185, %p186
    %p188 = scmp.ne.s32.totalorder %s174, %s175
    %p189 = scmp.eq.s32.totalorder %s17, 1
    %p190 = por %p188, %p189
    %p192 = scmp.ne.s32.totalorder %s175, %s191
    %p193 = scmp.eq.s32.totalorder %s17, 0
    %p194 = por %p192, %p193
    %p195 = scmp.le.s32.totalorder 1, %s11
    %p196 = scmp.lt.s32.totalorder %s11, 3
    %p197 = pnand %p195, %p196
    %p198 = pneg %p197
    // Predicated region
    $region9: #{sr_upsampling.1} parent=5 // pred_check
      _
    $region10: #{sr_upsampling.1} parent=5 // pred_check_branch
      %200 = sbr.rel (%p197) target = $region12
    $region11: #{sr_upsampling.1} parent=5 // pred_region
      %s201 = ssub.s32 %s11, 1
      // Predicated region
      $region13: #{sr_upsampling.1} parent=11 // pred_check
        %p202 = pneg %p138
      $region14: #{sr_upsampling.1} parent=11 // pred_check_branch
        %204 = sbr.rel (%p202) target = $region16
      $region15: #{sr_upsampling.1} parent=11 // pred_region
        _
      $region16: #{sr_upsampling.1} parent=11 // pred_fallthru
        _
      // Predicated region
      $region17: #{sr_upsampling.1} parent=11 // pred_check
        %p205 = pneg %p159
      $region18: #{sr_upsampling.1} parent=11 // pred_check_branch
        %207 = sbr.rel (%p205) target = $region20
      $region19: #{sr_upsampling.1} parent=11 // pred_region
        _
      $region20: #{sr_upsampling.1} parent=11 // pred_fallthru
        _
    $region12: #{sr_upsampling.1} parent=5 // pred_fallthru
      _
    %p208 = scmp.lt.s32.totalorder %s11, 2
    // Predicated region
    $region21: #{sr_upsampling.1} parent=5 // pred_check
      %p209 = pneg %p208
    $region22: #{sr_upsampling.1} parent=5 // pred_check_branch
      %211 = sbr.rel (%p209) target = $region24
    $region23: #{sr_upsampling.1} parent=5 // pred_region
      // Predicated region
      $region25: #{sr_upsampling.1} parent=23 // pred_check
        %p212 = pneg %p45
      $region26: #{sr_upsampling.1} parent=23 // pred_check_branch
        %214 = sbr.rel (%p212) target = $region28
      $region27: #{sr_upsampling.1} parent=23 // pred_region
        %s215 = smul.u32 16, %s19
        %s216 = ssub.s32 18, %s215
        %p217 = scmp.lt.s32.totalorder %s216, 16
        %s218 = scalar_select %p217, %s216, 16
        %s219 = smul.u32 8, %s218
        %s220 = smul.u32 %s219, 3
        %p221 = scmp.lt.s32.totalorder %s18, 1
        %s222 = scalar_select %p221, %s18, 1
        %p223 = scmp.lt.s32.totalorder %s215, 17
        %s224 = scalar_select %p223, %s215, 17
        %s225 = smul.addr %s224, 3
        %s226 = smul.addr %s222, 54
        %s227 = sadd.s32 %s225, %s226
        %s228 = smul.addr %s227, 8
        %s229 = scalar_lea.vmem %s0, %s228
        %s230 = smul.u32 16, %s19
        %s231 = ssub.s32 18, %s230
        %p232 = scmp.lt.s32.totalorder %s231, 16
        %s233 = scalar_select %p232, %s231, 16
        %s234 = smul.u32 8, %s233
        %s235 = smul.u32 %s234, 3
      $region28: #{sr_upsampling.1} parent=23 // pred_fallthru
        _
      // Predicated region
      $region29: #{sr_upsampling.1} parent=23 // pred_check
        %p236 = pneg %p77
      $region30: #{sr_upsampling.1} parent=23 // pred_check_branch
        %238 = sbr.rel (%p236) target = $region32
      $region31: #{sr_upsampling.1} parent=23 // pred_region
        %s239 = sadd.s32 %s19, 1
        %s240 = smul.u32 %s239, 16
        %p241 = scmp.lt.s32.totalorder %s18, 1
        %s242 = scalar_select %p241, %s18, 1
        %p243 = scmp.lt.s32.totalorder %s240, 17
        %s244 = scalar_select %p243, %s240, 17
        %s245 = smul.addr %s244, 3
        %s246 = smul.addr %s242, 54
        %s247 = sadd.s32 %s245, %s246
        %s248 = smul.addr %s247, 8
        %s249 = scalar_lea.vmem %s1, %s248
        %s250 = sadd.s32 %s19, 1
        %s251 = smul.u32 %s250, 16
      $region32: #{sr_upsampling.1} parent=23 // pred_fallthru
        _
      // Predicated region
      $region33: #{sr_upsampling.1} parent=23 // pred_check
        %p252 = pneg %p111
      $region34: #{sr_upsampling.1} parent=23 // pred_check_branch
        %254 = sbr.rel (%p252) target = $region36
      $region35: #{sr_upsampling.1} parent=23 // pred_region
        %s255 = sadd.s32 %s19, 1
        %s256 = smul.u32 %s255, 16
        %s257 = sadd.s32 %s256, 1
        %p258 = scmp.lt.s32.totalorder %s18, 1
        %s259 = scalar_select %p258, %s18, 1
        %p260 = scmp.lt.s32.totalorder %s257, 17
        %s261 = scalar_select %p260, %s257, 17
        %s262 = smul.addr %s261, 3
        %s263 = smul.addr %s259, 54
        %s264 = sadd.s32 %s262, %s263
        %s265 = smul.addr %s264, 8
        %s266 = scalar_lea.vmem %s2, %s265
        %s267 = sadd.s32 %s19, 1
        %s268 = smul.u32 %s267, 16
        %s269 = sadd.s32 %s268, 1
      $region36: #{sr_upsampling.1} parent=23 // pred_fallthru
        _
    $region24: #{sr_upsampling.1} parent=5 // pred_fallthru
      _
    %p270 = scmp.le.s32.totalorder 1, %s11
    %p271 = scmp.lt.s32.totalorder %s11, 3
    %p272 = pnand %p270, %p271
    %p273 = pneg %p272
    // Predicated region
    $region37: #{sr_upsampling.1} parent=5 // pred_check
      _
    $region38: #{sr_upsampling.1} parent=5 // pred_check_branch
      %275 = sbr.rel (%p272) target = $region40
    $region39: #{sr_upsampling.1} parent=5 // pred_region
      %s276 = ssub.s32 %s11, 1
      %s277 = smul.u32 16, %s21
      %s278 = ssub.s32 18, %s277
      %p279 = scmp.lt.s32.totalorder %s278, 16
      %s280 = scalar_select %p279, %s278, 16
      %s281 = smul.u32 8, %s280
      %s282 = smul.u32 %s281, 3
      %p283 = scmp.lt.s32.totalorder %s20, 1
      %s284 = scalar_select %p283, %s20, 1
      %p285 = scmp.lt.s32.totalorder %s277, 17
      %s286 = scalar_select %p285, %s277, 17
      %s287 = smul.addr %s286, 3
      %s288 = smul.addr %s284, 54
      %s289 = sadd.s32 %s287, %s288
      %s290 = smul.addr %s289, 8
      %s291 = scalar_lea.vmem %s0, %s290
      %p292 = pneg %p51
      %p293 = pneg %p48
      %s294 = sadd.s32 %s21, 1
      %s295 = smul.u32 %s294, 16
      %p296 = scmp.lt.s32.totalorder %s20, 1
      %s297 = scalar_select %p296, %s20, 1
      %p298 = scmp.lt.s32.totalorder %s295, 17
      %s299 = scalar_select %p298, %s295, 17
      %s300 = smul.addr %s299, 3
      %s301 = smul.addr %s297, 54
      %s302 = sadd.s32 %s300, %s301
      %s303 = smul.addr %s302, 8
      %s304 = scalar_lea.vmem %s1, %s303
      %p305 = pneg %p83
      %p306 = pneg %p80
      %s307 = sadd.s32 %s21, 1
      %s308 = smul.u32 %s307, 16
      %s309 = sadd.s32 %s308, 1
      %p310 = scmp.lt.s32.totalorder %s20, 1
      %s311 = scalar_select %p310, %s20, 1
      %p312 = scmp.lt.s32.totalorder %s309, 17
      %s313 = scalar_select %p312, %s309, 17
      %s314 = smul.addr %s313, 3
      %s315 = smul.addr %s311, 54
      %s316 = sadd.s32 %s314, %s315
      %s317 = smul.addr %s316, 8
      %s318 = scalar_lea.vmem %s2, %s317
      %p319 = pneg %p117
      %p320 = pneg %p114
      %p321 = pneg %p138
      %p322 = pneg %p135
      %p323 = pneg %p159
      %p324 = pneg %p156
      %p325 = pneg %p187
      %p326 = pneg %p184
      %s327 = smul.u32 16, %s21
      %p328 = scmp.lt.s32.totalorder %s20, 1
      %s329 = scalar_select %p328, %s20, 1
      %p330 = scmp.lt.s32.totalorder %s327, 15
      %s331 = scalar_select %p330, %s327, 15
      %s332 = smul.addr %s331, 4
      %s333 = smul.addr %s329, 64
      %s334 = sadd.s32 %s332, %s333
      %s335 = smul.addr %s334, 8
      %s336 = scalar_lea.vmem %s5, %s335
      %s337 = smul.u32 16, %s21
      %s338 = ssub.s32 18, %s337
      %p339 = scmp.lt.s32.totalorder %s338, 16
      %s340 = scalar_select %p339, %s338, 16
      %s341 = smul.u32 8, %s340
      %s342 = smul.u32 %s341, 3
      %p343 = scmp.lt.s32.totalorder %s20, 1
      %s344 = scalar_select %p343, %s20, 1
      %p345 = scmp.lt.s32.totalorder %s337, 17
      %s346 = scalar_select %p345, %s337, 17
      %s347 = smul.addr %s346, 3
      %s348 = smul.addr %s344, 54
      %s349 = sadd.s32 %s347, %s348
      %s350 = smul.addr %s349, 8
      %s351 = scalar_lea.vmem %s0, %s350
      %s352 = smul.u32 16, %s21
      %s353 = ssub.s32 18, %s352
      %p354 = scmp.lt.s32.totalorder %s353, 16
      %s355 = scalar_select %p354, %s353, 16
      %s356 = smul.u32 8, %s355
      %s357 = smul.u32 %s356, 3
      %s358 = sadd.s32 %s21, 1
      %s359 = smul.u32 %s358, 16
      %p360 = scmp.lt.s32.totalorder %s20, 1
      %s361 = scalar_select %p360, %s20, 1
      %p362 = scmp.lt.s32.totalorder %s359, 17
      %s363 = scalar_select %p362, %s359, 17
      %s364 = smul.addr %s363, 3
      %s365 = smul.addr %s361, 54
      %s366 = sadd.s32 %s364, %s365
      %s367 = smul.addr %s366, 8
      %s368 = scalar_lea.vmem %s1, %s367
      %s369 = sadd.s32 %s21, 1
      %s370 = smul.u32 %s369, 16
      %s371 = sadd.s32 %s21, 1
      %s372 = smul.u32 %s371, 16
      %s373 = sadd.s32 %s372, 1
      %p374 = scmp.lt.s32.totalorder %s20, 1
      %s375 = scalar_select %p374, %s20, 1
      %p376 = scmp.lt.s32.totalorder %s373, 17
      %s377 = scalar_select %p376, %s373, 17
      %s378 = smul.addr %s377, 3
      %s379 = smul.addr %s375, 54
      %s380 = sadd.s32 %s378, %s379
      %s381 = smul.addr %s380, 8
      %s382 = scalar_lea.vmem %s2, %s381
      %s383 = sadd.s32 %s21, 1
      %s384 = smul.u32 %s383, 16
      %s385 = sadd.s32 %s384, 1
      %s386 = smul.u32 16, %s21
      %p387 = scmp.lt.s32.totalorder %s20, 1
      %s388 = scalar_select %p387, %s20, 1
      %p389 = scmp.lt.s32.totalorder %s386, 15
      %s390 = scalar_select %p389, %s386, 15
      %s391 = smul.addr %s390, 4
      %s392 = smul.addr %s388, 64
      %s393 = sadd.s32 %s391, %s392
      %s394 = smul.addr %s393, 8
      %s395 = scalar_lea.vmem %s5, %s394
      %s396 = smul.u32 16, %s21
      %v397 = vld [vmem:[%s351] sm:$0xff]
      %v398 = vld [vmem:[%s351 + $0x8] sm:$0xff]
      %v399 = vld [vmem:[%s351 + $0x10] sm:$0x3]
      %v400 = vld [vmem:[%s351 + $0x18] sm:$0xff]
      %v401 = vld [vmem:[%s351 + $0x20] sm:$0xff]
      %v402 = vld [vmem:[%s351 + $0x28] sm:$0x3]
      %v403 = vld [vmem:[%s351 + $0x30] sm:$0xff]
      %v404 = vld [vmem:[%s351 + $0x38] sm:$0xff]
      %v405 = vld [vmem:[%s351 + $0x40] sm:$0x3]
      %v406 = vld [vmem:[%s351 + $0x48] sm:$0xff]
      %v407 = vld [vmem:[%s351 + $0x50] sm:$0xff]
      %v408 = vld [vmem:[%s351 + $0x58] sm:$0x3]
      %v409 = vld [vmem:[%s351 + $0x60] sm:$0xff]
      %v410 = vld [vmem:[%s351 + $0x68] sm:$0xff]
      %v411 = vld [vmem:[%s351 + $0x70] sm:$0x3]
      %v412 = vld [vmem:[%s351 + $0x78] sm:$0xff]
      %v413 = vld [vmem:[%s351 + $0x80] sm:$0xff]
      %v414 = vld [vmem:[%s351 + $0x88] sm:$0x3]
      %v415 = vld [vmem:[%s351 + $0x90] sm:$0xff]
      %v416 = vld [vmem:[%s351 + $0x98] sm:$0xff]
      %v417 = vld [vmem:[%s351 + $0xa0] sm:$0x3]
      %v418 = vld [vmem:[%s351 + $0xa8] sm:$0xff]
      %v419 = vld [vmem:[%s351 + $0xb0] sm:$0xff]
      %v420 = vld [vmem:[%s351 + $0xb8] sm:$0x3]
      %v421 = vld [vmem:[%s351 + $0xc0] sm:$0xff]
      %v422 = vld [vmem:[%s351 + $0xc8] sm:$0xff]
      %v423 = vld [vmem:[%s351 + $0xd0] sm:$0x3]
      %v424 = vld [vmem:[%s351 + $0xd8] sm:$0xff]
      %v425 = vld [vmem:[%s351 + $0xe0] sm:$0xff]
      %v426 = vld [vmem:[%s351 + $0xe8] sm:$0x3]
      %v427 = vld [vmem:[%s351 + $0xf0] sm:$0xff]
      %v428 = vld [vmem:[%s351 + $0xf8] sm:$0xff]
      %v429 = vld [vmem:[%s351 + $0x100] sm:$0x3]
      %v430 = vld [vmem:[%s351 + $0x108] sm:$0xff]
      %v431 = vld [vmem:[%s351 + $0x110] sm:$0xff]
      %v432 = vld [vmem:[%s351 + $0x118] sm:$0x3]
      %v433 = vld [vmem:[%s351 + $0x120] sm:$0xff]
      %v434 = vld [vmem:[%s351 + $0x128] sm:$0xff]
      %v435 = vld [vmem:[%s351 + $0x130] sm:$0x3]
      %v436 = vld [vmem:[%s351 + $0x138] sm:$0xff]
      %v437 = vld [vmem:[%s351 + $0x140] sm:$0xff]
      %v438 = vld [vmem:[%s351 + $0x148] sm:$0x3]
      %v439 = vld [vmem:[%s351 + $0x150] sm:$0xff]
      %v440 = vld [vmem:[%s351 + $0x158] sm:$0xff]
      %v441 = vld [vmem:[%s351 + $0x160] sm:$0x3]
      %v442 = vld [vmem:[%s351 + $0x168] sm:$0xff]
      %v443 = vld [vmem:[%s351 + $0x170] sm:$0xff]
      %v444 = vld [vmem:[%s351 + $0x178] sm:$0x3]
      %v445 = vld [vmem:[%s368] sm:$0xff]
      %v446 = vld [vmem:[%s368 + $0x8] sm:$0xff]
      %v447 = vld [vmem:[%s368 + $0x10] sm:$0x3]
      %v448 = vld [vmem:[%s382] sm:$0xff]
      %v449 = vld [vmem:[%s382 + $0x8] sm:$0xff]
      %v450 = vld [vmem:[%s382 + $0x10] sm:$0x3]
      %vm499 = vcmask 1046528
      %v500 = vrot.slane %v397, 1
      %v501 = vrot.slane %v398, 1
      %v502 = vsel %vm499, %v500, %v501
      %v503 = vrot.slane %v399, 1
      %v504 = vsel %vm499, %v501, %v503
      %v505 = vrot.slane %v400, 1
      %v506 = vrot.slane %v401, 1
      %v507 = vsel %vm499, %v505, %v506
      %v508 = vrot.slane %v402, 1
      %v509 = vsel %vm499, %v506, %v508
      %v510 = vrot.slane %v403, 1
      %v511 = vrot.slane %v404, 1
      %v512 = vsel %vm499, %v510, %v511
      %v513 = vrot.slane %v405, 1
      %v514 = vsel %vm499, %v511, %v513
      %v515 = vrot.slane %v406, 1
      %v516 = vrot.slane %v407, 1
      %v517 = vsel %vm499, %v515, %v516
      %v518 = vrot.slane %v408, 1
      %v519 = vsel %vm499, %v516, %v518
      %v520 = vrot.slane %v409, 1
      %v521 = vrot.slane %v410, 1
      %v522 = vsel %vm499, %v520, %v521
      %v523 = vrot.slane %v411, 1
      %v524 = vsel %vm499, %v521, %v523
      %v525 = vrot.slane %v412, 1
      %v526 = vrot.slane %v413, 1
      %v527 = vsel %vm499, %v525, %v526
      %v528 = vrot.slane %v414, 1
      %v529 = vsel %vm499, %v526, %v528
      %v530 = vrot.slane %v415, 1
      %v531 = vrot.slane %v416, 1
      %v532 = vsel %vm499, %v530, %v531
      %v533 = vrot.slane %v417, 1
      %v534 = vsel %vm499, %v531, %v533
      %v535 = vrot.slane %v418, 1
      %v536 = vrot.slane %v419, 1
      %v537 = vsel %vm499, %v535, %v536
      %v538 = vrot.slane %v420, 1
      %v539 = vsel %vm499, %v536, %v538
      %v540 = vrot.slane %v421, 1
      %v541 = vrot.slane %v422, 1
      %v542 = vsel %vm499, %v540, %v541
      %v543 = vrot.slane %v423, 1
      %v544 = vsel %vm499, %v541, %v543
      %v545 = vrot.slane %v424, 1
      %v546 = vrot.slane %v425, 1
      %v547 = vsel %vm499, %v545, %v546
      %v548 = vrot.slane %v426, 1
      %v549 = vsel %vm499, %v546, %v548
      %v550 = vrot.slane %v427, 1
      %v551 = vrot.slane %v428, 1
      %v552 = vsel %vm499, %v550, %v551
      %v553 = vrot.slane %v429, 1
      %v554 = vsel %vm499, %v551, %v553
      %v555 = vrot.slane %v430, 1
      %v556 = vrot.slane %v431, 1
      %v557 = vsel %vm499, %v555, %v556
      %v558 = vrot.slane %v432, 1
      %v559 = vsel %vm499, %v556, %v558
      %v560 = vrot.slane %v433, 1
      %v561 = vrot.slane %v434, 1
      %v562 = vsel %vm499, %v560, %v561
      %v563 = vrot.slane %v435, 1
      %v564 = vsel %vm499, %v561, %v563
      %v565 = vrot.slane %v436, 1
      %v566 = vrot.slane %v437, 1
      %v567 = vsel %vm499, %v565, %v566
      %v568 = vrot.slane %v438, 1
      %v569 = vsel %vm499, %v566, %v568
      %v570 = vrot.slane %v439, 1
      %v571 = vrot.slane %v440, 1
      %v572 = vsel %vm499, %v570, %v571
      %v573 = vrot.slane %v441, 1
      %v574 = vsel %vm499, %v571, %v573
      %v575 = vrot.slane %v442, 1
      %v576 = vrot.slane %v443, 1
      %v577 = vsel %vm499, %v575, %v576
      %v578 = vrot.slane %v444, 1
      %v579 = vsel %vm499, %v576, %v578
      %580 = vrot.lane.b32.xlu0 %v502, 4
      %v581 = vpop.permute.xlu0 %580
      %582 = vrot.lane.b32.xlu0 %v504, 4
      %v583 = vpop.permute.xlu0 %582
      %584 = vrot.lane.b32.xlu0 %v507, 4
      %v585 = vpop.permute.xlu0 %584
      %586 = vrot.lane.b32.xlu0 %v509, 4
      %v587 = vpop.permute.xlu0 %586
      %588 = vrot.lane.b32.xlu0 %v512, 4
      %v589 = vpop.permute.xlu0 %588
      %590 = vrot.lane.b32.xlu0 %v514, 4
      %v591 = vpop.permute.xlu0 %590
      %592 = vrot.lane.b32.xlu0 %v517, 4
      %v593 = vpop.permute.xlu0 %592
      %594 = vrot.lane.b32.xlu0 %v519, 4
      %v595 = vpop.permute.xlu0 %594
      %596 = vrot.lane.b32.xlu0 %v522, 4
      %v597 = vpop.permute.xlu0 %596
      %598 = vrot.lane.b32.xlu0 %v524, 4
      %v599 = vpop.permute.xlu0 %598
      %600 = vrot.lane.b32.xlu0 %v527, 4
      %v601 = vpop.permute.xlu0 %600
      %602 = vrot.lane.b32.xlu0 %v529, 4
      %v603 = vpop.permute.xlu0 %602
      %604 = vrot.lane.b32.xlu0 %v532, 4
      %v605 = vpop.permute.xlu0 %604
      %606 = vrot.lane.b32.xlu0 %v534, 4
      %v607 = vpop.permute.xlu0 %606
      %608 = vrot.lane.b32.xlu0 %v537, 4
      %v609 = vpop.permute.xlu0 %608
      %610 = vrot.lane.b32.xlu0 %v539, 4
      %v611 = vpop.permute.xlu0 %610
      %612 = vrot.lane.b32.xlu0 %v542, 4
      %v613 = vpop.permute.xlu0 %612
      %614 = vrot.lane.b32.xlu0 %v544, 4
      %v615 = vpop.permute.xlu0 %614
      %616 = vrot.lane.b32.xlu0 %v547, 4
      %v617 = vpop.permute.xlu0 %616
      %618 = vrot.lane.b32.xlu0 %v549, 4
      %v619 = vpop.permute.xlu0 %618
      %620 = vrot.lane.b32.xlu0 %v552, 4
      %v621 = vpop.permute.xlu0 %620
      %622 = vrot.lane.b32.xlu0 %v554, 4
      %v623 = vpop.permute.xlu0 %622
      %624 = vrot.lane.b32.xlu0 %v557, 4
      %v625 = vpop.permute.xlu0 %624
      %626 = vrot.lane.b32.xlu0 %v559, 4
      %v627 = vpop.permute.xlu0 %626
      %628 = vrot.lane.b32.xlu0 %v562, 4
      %v629 = vpop.permute.xlu0 %628
      %630 = vrot.lane.b32.xlu0 %v564, 4
      %v631 = vpop.permute.xlu0 %630
      %632 = vrot.lane.b32.xlu0 %v567, 4
      %v633 = vpop.permute.xlu0 %632
      %634 = vrot.lane.b32.xlu0 %v569, 4
      %v635 = vpop.permute.xlu0 %634
      %636 = vrot.lane.b32.xlu0 %v572, 4
      %v637 = vpop.permute.xlu0 %636
      %638 = vrot.lane.b32.xlu0 %v574, 4
      %v639 = vpop.permute.xlu0 %638
      %640 = vrot.lane.b32.xlu0 %v577, 4
      %v641 = vpop.permute.xlu0 %640
      %642 = vrot.lane.b32.xlu0 %v579, 4
      %v643 = vpop.permute.xlu0 %642
      %vm676 = vcmask 1045504
      %v677 = vrot.slane %v397, 2
      %v678 = vrot.slane %v398, 2
      %v679 = vsel %vm676, %v677, %v678
      %v680 = vrot.slane %v399, 2
      %v681 = vsel %vm676, %v678, %v680
      %v682 = vrot.slane %v400, 2
      %v683 = vrot.slane %v401, 2
      %v684 = vsel %vm676, %v682, %v683
      %v685 = vrot.slane %v402, 2
      %v686 = vsel %vm676, %v683, %v685
      %v687 = vrot.slane %v403, 2
      %v688 = vrot.slane %v404, 2
      %v689 = vsel %vm676, %v687, %v688
      %v690 = vrot.slane %v405, 2
      %v691 = vsel %vm676, %v688, %v690
      %v692 = vrot.slane %v406, 2
      %v693 = vrot.slane %v407, 2
      %v694 = vsel %vm676, %v692, %v693
      %v695 = vrot.slane %v408, 2
      %v696 = vsel %vm676, %v693, %v695
      %v697 = vrot.slane %v409, 2
      %v698 = vrot.slane %v410, 2
      %v699 = vsel %vm676, %v697, %v698
      %v700 = vrot.slane %v411, 2
      %v701 = vsel %vm676, %v698, %v700
      %v702 = vrot.slane %v412, 2
      %v703 = vrot.slane %v413, 2
      %v704 = vsel %vm676, %v702, %v703
      %v705 = vrot.slane %v414, 2
      %v706 = vsel %vm676, %v703, %v705
      %v707 = vrot.slane %v415, 2
      %v708 = vrot.slane %v416, 2
      %v709 = vsel %vm676, %v707, %v708
      %v710 = vrot.slane %v417, 2
      %v711 = vsel %vm676, %v708, %v710
      %v712 = vrot.slane %v418, 2
      %v713 = vrot.slane %v419, 2
      %v714 = vsel %vm676, %v712, %v713
      %v715 = vrot.slane %v420, 2
      %v716 = vsel %vm676, %v713, %v715
      %v717 = vrot.slane %v421, 2
      %v718 = vrot.slane %v422, 2
      %v719 = vsel %vm676, %v717, %v718
      %v720 = vrot.slane %v423, 2
      %v721 = vsel %vm676, %v718, %v720
      %v722 = vrot.slane %v424, 2
      %v723 = vrot.slane %v425, 2
      %v724 = vsel %vm676, %v722, %v723
      %v725 = vrot.slane %v426, 2
      %v726 = vsel %vm676, %v723, %v725
      %v727 = vrot.slane %v427, 2
      %v728 = vrot.slane %v428, 2
      %v729 = vsel %vm676, %v727, %v728
      %v730 = vrot.slane %v429, 2
      %v731 = vsel %vm676, %v728, %v730
      %v732 = vrot.slane %v430, 2
      %v733 = vrot.slane %v431, 2
      %v734 = vsel %vm676, %v732, %v733
      %v735 = vrot.slane %v432, 2
      %v736 = vsel %vm676, %v733, %v735
      %v737 = vrot.slane %v433, 2
      %v738 = vrot.slane %v434, 2
      %v739 = vsel %vm676, %v737, %v738
      %v740 = vrot.slane %v435, 2
      %v741 = vsel %vm676, %v738, %v740
      %v742 = vrot.slane %v436, 2
      %v743 = vrot.slane %v437, 2
      %v744 = vsel %vm676, %v742, %v743
      %v745 = vrot.slane %v438, 2
      %v746 = vsel %vm676, %v743, %v745
      %v747 = vrot.slane %v439, 2
      %v748 = vrot.slane %v440, 2
      %v749 = vsel %vm676, %v747, %v748
      %v750 = vrot.slane %v441, 2
      %v751 = vsel %vm676, %v748, %v750
      %v752 = vrot.slane %v442, 2
      %v753 = vrot.slane %v443, 2
      %v754 = vsel %vm676, %v752, %v753
      %v755 = vrot.slane %v444, 2
      %v756 = vsel %vm676, %v753, %v755
      %757 = vrot.lane.b32.xlu0 %v679, 8
      %v758 = vpop.permute.xlu0 %757
      %759 = vrot.lane.b32.xlu0 %v681, 8
      %v760 = vpop.permute.xlu0 %759
      %761 = vrot.lane.b32.xlu0 %v684, 8
      %v762 = vpop.permute.xlu0 %761
      %763 = vrot.lane.b32.xlu0 %v686, 8
      %v764 = vpop.permute.xlu0 %763
      %765 = vrot.lane.b32.xlu0 %v689, 8
      %v766 = vpop.permute.xlu0 %765
      %767 = vrot.lane.b32.xlu0 %v691, 8
      %v768 = vpop.permute.xlu0 %767
      %769 = vrot.lane.b32.xlu0 %v694, 8
      %v770 = vpop.permute.xlu0 %769
      %771 = vrot.lane.b32.xlu0 %v696, 8
      %v772 = vpop.permute.xlu0 %771
      %773 = vrot.lane.b32.xlu0 %v699, 8
      %v774 = vpop.permute.xlu0 %773
      %775 = vrot.lane.b32.xlu0 %v701, 8
      %v776 = vpop.permute.xlu0 %775
      %777 = vrot.lane.b32.xlu0 %v704, 8
      %v778 = vpop.permute.xlu0 %777
      %779 = vrot.lane.b32.xlu0 %v706, 8
      %v780 = vpop.permute.xlu0 %779
      %781 = vrot.lane.b32.xlu0 %v709, 8
      %v782 = vpop.permute.xlu0 %781
      %783 = vrot.lane.b32.xlu0 %v711, 8
      %v784 = vpop.permute.xlu0 %783
      %785 = vrot.lane.b32.xlu0 %v714, 8
      %v786 = vpop.permute.xlu0 %785
      %787 = vrot.lane.b32.xlu0 %v716, 8
      %v788 = vpop.permute.xlu0 %787
      %789 = vrot.lane.b32.xlu0 %v719, 8
      %v790 = vpop.permute.xlu0 %789
      %791 = vrot.lane.b32.xlu0 %v721, 8
      %v792 = vpop.permute.xlu0 %791
      %793 = vrot.lane.b32.xlu0 %v724, 8
      %v794 = vpop.permute.xlu0 %793
      %795 = vrot.lane.b32.xlu0 %v726, 8
      %v796 = vpop.permute.xlu0 %795
      %797 = vrot.lane.b32.xlu0 %v729, 8
      %v798 = vpop.permute.xlu0 %797
      %799 = vrot.lane.b32.xlu0 %v731, 8
      %v800 = vpop.permute.xlu0 %799
      %801 = vrot.lane.b32.xlu0 %v734, 8
      %v802 = vpop.permute.xlu0 %801
      %803 = vrot.lane.b32.xlu0 %v736, 8
      %v804 = vpop.permute.xlu0 %803
      %805 = vrot.lane.b32.xlu0 %v739, 8
      %v806 = vpop.permute.xlu0 %805
      %807 = vrot.lane.b32.xlu0 %v741, 8
      %v808 = vpop.permute.xlu0 %807
      %809 = vrot.lane.b32.xlu0 %v744, 8
      %v810 = vpop.permute.xlu0 %809
      %811 = vrot.lane.b32.xlu0 %v746, 8
      %v812 = vpop.permute.xlu0 %811
      %813 = vrot.lane.b32.xlu0 %v749, 8
      %v814 = vpop.permute.xlu0 %813
      %815 = vrot.lane.b32.xlu0 %v751, 8
      %v816 = vpop.permute.xlu0 %815
      %817 = vrot.lane.b32.xlu0 %v754, 8
      %v818 = vpop.permute.xlu0 %817
      %819 = vrot.lane.b32.xlu0 %v756, 8
      %v820 = vpop.permute.xlu0 %819
      %vm853 = vcmask 31744
      %v854 = vsel %vm853, %v397, %v581
      %v855 = vsel %vm853, %v398, %v583
      %v856 = vsel %vm853, %v400, %v585
      %v857 = vsel %vm853, %v401, %v587
      %v858 = vsel %vm853, %v403, %v589
      %v859 = vsel %vm853, %v404, %v591
      %v860 = vsel %vm853, %v406, %v593
      %v861 = vsel %vm853, %v407, %v595
      %v862 = vsel %vm853, %v409, %v597
      %v863 = vsel %vm853, %v410, %v599
      %v864 = vsel %vm853, %v412, %v601
      %v865 = vsel %vm853, %v413, %v603
      %v866 = vsel %vm853, %v415, %v605
      %v867 = vsel %vm853, %v416, %v607
      %v868 = vsel %vm853, %v418, %v609
      %v869 = vsel %vm853, %v419, %v611
      %v870 = vsel %vm853, %v421, %v613
      %v871 = vsel %vm853, %v422, %v615
      %v872 = vsel %vm853, %v424, %v617
      %v873 = vsel %vm853, %v425, %v619
      %v874 = vsel %vm853, %v427, %v621
      %v875 = vsel %vm853, %v428, %v623
      %v876 = vsel %vm853, %v430, %v625
      %v877 = vsel %vm853, %v431, %v627
      %v878 = vsel %vm853, %v433, %v629
      %v879 = vsel %vm853, %v434, %v631
      %v880 = vsel %vm853, %v436, %v633
      %v881 = vsel %vm853, %v437, %v635
      %v882 = vsel %vm853, %v439, %v637
      %v883 = vsel %vm853, %v440, %v639
      %v884 = vsel %vm853, %v442, %v641
      %v885 = vsel %vm853, %v443, %v643
      %vm886 = vcmask 64512
      %v887 = vsel %vm886, %v854, %v758
      %v888 = vsel %vm886, %v855, %v760
      %v889 = vsel %vm886, %v856, %v762
      %v890 = vsel %vm886, %v857, %v764
      %v891 = vsel %vm886, %v858, %v766
      %v892 = vsel %vm886, %v859, %v768
      %v893 = vsel %vm886, %v860, %v770
      %v894 = vsel %vm886, %v861, %v772
      %v895 = vsel %vm886, %v862, %v774
      %v896 = vsel %vm886, %v863, %v776
      %v897 = vsel %vm886, %v864, %v778
      %v898 = vsel %vm886, %v865, %v780
      %v899 = vsel %vm886, %v866, %v782
      %v900 = vsel %vm886, %v867, %v784
      %v901 = vsel %vm886, %v868, %v786
      %v902 = vsel %vm886, %v869, %v788
      %v903 = vsel %vm886, %v870, %v790
      %v904 = vsel %vm886, %v871, %v792
      %v905 = vsel %vm886, %v872, %v794
      %v906 = vsel %vm886, %v873, %v796
      %v907 = vsel %vm886, %v874, %v798
      %v908 = vsel %vm886, %v875, %v800
      %v909 = vsel %vm886, %v876, %v802
      %v910 = vsel %vm886, %v877, %v804
      %v911 = vsel %vm886, %v878, %v806
      %v912 = vsel %vm886, %v879, %v808
      %v913 = vsel %vm886, %v880, %v810
      %v914 = vsel %vm886, %v881, %v812
      %v915 = vsel %vm886, %v882, %v814
      %v916 = vsel %vm886, %v883, %v816
      %v917 = vsel %vm886, %v884, %v818
      %v918 = vsel %vm886, %v885, %v820
      %v919 = vld [vmem:[%s3] sm:$0xff]
      %v920 = vld [vmem:[%s3 + $0x8] sm:$0xf]
      %v924 = vrot.slane %v445, 1
      %v925 = vrot.slane %v446, 1
      %v926 = vsel %vm499, %v924, %v925
      %v927 = vrot.slane %v447, 1
      %v928 = vsel %vm499, %v925, %v927
      %929 = vrot.lane.b32.xlu0 %v926, 4
      %v930 = vpop.permute.xlu0 %929
      %931 = vrot.lane.b32.xlu0 %v928, 4
      %v932 = vpop.permute.xlu0 %931
      %v935 = vrot.slane %v445, 2
      %v936 = vrot.slane %v446, 2
      %v937 = vsel %vm676, %v935, %v936
      %v938 = vrot.slane %v447, 2
      %v939 = vsel %vm676, %v936, %v938
      %940 = vrot.lane.b32.xlu0 %v937, 8
      %v941 = vpop.permute.xlu0 %940
      %942 = vrot.lane.b32.xlu0 %v939, 8
      %v943 = vpop.permute.xlu0 %942
      %v946 = vsel %vm853, %v445, %v930
      %v947 = vsel %vm853, %v446, %v932
      %v948 = vsel %vm886, %v946, %v941
      %v949 = vsel %vm886, %v947, %v943
      %s950 = scalar_lea.vmem %s3, 16
      %v951 = vld [vmem:[%s950] sm:$0xff]
      %v952 = vld [vmem:[%s950 + $0x8] sm:$0xf]
      %vm953 = vcmask 97280
      %v955 = vsel %vm953, %v889, 0
      %v958 = vsel %vm953, %v890, 0
      %v961 = vsel %vm953, %v891, 0
      %v964 = vsel %vm953, %v892, 0
      %v967 = vsel %vm953, %v893, 0
      %v970 = vsel %vm953, %v894, 0
      %v973 = vsel %vm953, %v895, 0
      %v976 = vsel %vm953, %v896, 0
      %v979 = vsel %vm953, %v897, 0
      %v982 = vsel %vm953, %v898, 0
      %v985 = vsel %vm953, %v899, 0
      %v988 = vsel %vm953, %v900, 0
      %v991 = vsel %vm953, %v901, 0
      %v994 = vsel %vm953, %v902, 0
      %v997 = vsel %vm953, %v903, 0
      %v1000 = vsel %vm953, %v904, 0
      %v1003 = vsel %vm953, %v905, 0
      %v1006 = vsel %vm953, %v906, 0
      %v1009 = vsel %vm953, %v907, 0
      %v1012 = vsel %vm953, %v908, 0
      %v1015 = vsel %vm953, %v909, 0
      %v1018 = vsel %vm953, %v910, 0
      %v1021 = vsel %vm953, %v911, 0
      %v1024 = vsel %vm953, %v912, 0
      %v1027 = vsel %vm953, %v913, 0
      %v1030 = vsel %vm953, %v914, 0
      %v1033 = vsel %vm953, %v915, 0
      %v1036 = vsel %vm953, %v916, 0
      %v1039 = vsel %vm953, %v917, 0
      %v1042 = vsel %vm953, %v918, 0
      %v1045 = vsel %vm953, %v948, 0
      %v1048 = vsel %vm953, %v949, 0
      %vm1050 = vcmask 1043456
      %v1052 = vsel %vm1050, %v952, 0
      %1054 = vmatpush.msra.mxu0 0.0
      %1055 = vmatpush.msra.mxu0 0.0
      %1056 = vmatpush.msra.mxu0 0.0
      %1057 = vmatpush.msra.mxu0 0.0
      %1058 = vmatpush.msra.mxu0 0.0
      %1059 = vmatpush.msra.mxu0 0.0
      %1060 = vmatpush.msra.mxu0 0.0
      %1061 = vmatpush.msra.mxu0 0.0
      %1062 = vmatpush.msra.mxu0 0.0
      %1063 = vmatpush.msra.mxu0 0.0
      %1064 = vmatpush.msra.mxu0 0.0
      %1065 = vmatpush.msra.mxu0 0.0
      %1066 = vmatpush.msra.mxu0 0.0
      %1067 = vmatpush.msra.mxu0 0.0
      %1068 = vmatpush.msra.mxu0 %v1052
      %1069 = vmatpush.msra.mxu0 %v951
      %1070 = vmatmul.f32.gmra.mxu0 %v955
      %v1071 = vpop.f32.mrf.mxu0
      %v1072 = vadd.f32 0.0, %v1071
      %1073 = vmatmul.f32.gmra.mxu0 %v958
      %v1074 = vpop.f32.mrf.mxu0
      %v1075 = vadd.f32 0.0, %v1074
      %1076 = vmatmul.f32.gmra.mxu0 %v961
      %v1077 = vpop.f32.mrf.mxu0
      %v1078 = vadd.f32 0.0, %v1077
      %1079 = vmatmul.f32.gmra.mxu0 %v964
      %v1080 = vpop.f32.mrf.mxu0
      %v1081 = vadd.f32 0.0, %v1080
      %1082 = vmatmul.f32.gmra.mxu0 %v967
      %v1083 = vpop.f32.mrf.mxu0
      %v1084 = vadd.f32 0.0, %v1083
      %1085 = vmatmul.f32.gmra.mxu0 %v970
      %v1086 = vpop.f32.mrf.mxu0
      %v1087 = vadd.f32 0.0, %v1086
      %1088 = vmatmul.f32.gmra.mxu0 %v973
      %v1089 = vpop.f32.mrf.mxu0
      %v1090 = vadd.f32 0.0, %v1089
      %1091 = vmatmul.f32.gmra.mxu0 %v976
      %v1092 = vpop.f32.mrf.mxu0
      %v1093 = vadd.f32 0.0, %v1092
      %1094 = vmatmul.f32.gmra.mxu0 %v979
      %v1095 = vpop.f32.mrf.mxu0
      %v1096 = vadd.f32 0.0, %v1095
      %1097 = vmatmul.f32.gmra.mxu0 %v982
      %v1098 = vpop.f32.mrf.mxu0
      %v1099 = vadd.f32 0.0, %v1098
      %1100 = vmatmul.f32.gmra.mxu0 %v985
      %v1101 = vpop.f32.mrf.mxu0
      %v1102 = vadd.f32 0.0, %v1101
      %1103 = vmatmul.f32.gmra.mxu0 %v988
      %v1104 = vpop.f32.mrf.mxu0
      %v1105 = vadd.f32 0.0, %v1104
      %1106 = vmatmul.f32.gmra.mxu0 %v991
      %v1107 = vpop.f32.mrf.mxu0
      %v1108 = vadd.f32 0.0, %v1107
      %1109 = vmatmul.f32.gmra.mxu0 %v994
      %v1110 = vpop.f32.mrf.mxu0
      %v1111 = vadd.f32 0.0, %v1110
      %1112 = vmatmul.f32.gmra.mxu0 %v997
      %v1113 = vpop.f32.mrf.mxu0
      %v1114 = vadd.f32 0.0, %v1113
      %1115 = vmatmul.f32.gmra.mxu0 %v1000
      %v1116 = vpop.f32.mrf.mxu0
      %v1117 = vadd.f32 0.0, %v1116
      %1118 = vmatmul.f32.gmra.mxu0 %v1003
      %v1119 = vpop.f32.mrf.mxu0
      %v1120 = vadd.f32 0.0, %v1119
      %1121 = vmatmul.f32.gmra.mxu0 %v1006
      %v1122 = vpop.f32.mrf.mxu0
      %v1123 = vadd.f32 0.0, %v1122
      %1124 = vmatmul.f32.gmra.mxu0 %v1009
      %v1125 = vpop.f32.mrf.mxu0
      %v1126 = vadd.f32 0.0, %v1125
      %1127 = vmatmul.f32.gmra.mxu0 %v1012
      %v1128 = vpop.f32.mrf.mxu0
      %v1129 = vadd.f32 0.0, %v1128
      %1130 = vmatmul.f32.gmra.mxu0 %v1015
      %v1131 = vpop.f32.mrf.mxu0
      %v1132 = vadd.f32 0.0, %v1131
      %1133 = vmatmul.f32.gmra.mxu0 %v1018
      %v1134 = vpop.f32.mrf.mxu0
      %v1135 = vadd.f32 0.0, %v1134
      %1136 = vmatmul.f32.gmra.mxu0 %v1021
      %v1137 = vpop.f32.mrf.mxu0
      %v1138 = vadd.f32 0.0, %v1137
      %1139 = vmatmul.f32.gmra.mxu0 %v1024
      %v1140 = vpop.f32.mrf.mxu0
      %v1141 = vadd.f32 0.0, %v1140
      %1142 = vmatmul.f32.gmra.mxu0 %v1027
      %v1143 = vpop.f32.mrf.mxu0
      %v1144 = vadd.f32 0.0, %v1143
      %1145 = vmatmul.f32.gmra.mxu0 %v1030
      %v1146 = vpop.f32.mrf.mxu0
      %v1147 = vadd.f32 0.0, %v1146
      %1148 = vmatmul.f32.gmra.mxu0 %v1033
      %v1149 = vpop.f32.mrf.mxu0
      %v1150 = vadd.f32 0.0, %v1149
      %1151 = vmatmul.f32.gmra.mxu0 %v1036
      %v1152 = vpop.f32.mrf.mxu0
      %v1153 = vadd.f32 0.0, %v1152
      %1154 = vmatmul.f32.gmra.mxu0 %v1039
      %v1155 = vpop.f32.mrf.mxu0
      %v1156 = vadd.f32 0.0, %v1155
      %1157 = vmatmul.f32.gmra.mxu0 %v1042
      %v1158 = vpop.f32.mrf.mxu0
      %v1159 = vadd.f32 0.0, %v1158
      %1160 = vmatmul.f32.gmra.mxu0 %v1045
      %v1161 = vpop.f32.mrf.mxu0
      %v1162 = vadd.f32 0.0, %v1161
      %1163 = vmatmul.f32.gmra.mxu0 %v1048
      %v1164 = vpop.f32.mrf.mxu0
      %v1165 = vadd.f32 0.0, %v1164
      %1166 = vdwg.mxu0
      %v1168 = vsel %vm953, %v887, 0
      %v1171 = vsel %vm953, %v888, 0
      %v1174 = vsel %vm1050, %v920, 0
      %1176 = vmatpush.msra.mxu0 0.0
      %1177 = vmatpush.msra.mxu0 0.0
      %1178 = vmatpush.msra.mxu0 0.0
      %1179 = vmatpush.msra.mxu0 0.0
      %1180 = vmatpush.msra.mxu0 0.0
      %1181 = vmatpush.msra.mxu0 0.0
      %1182 = vmatpush.msra.mxu0 0.0
      %1183 = vmatpush.msra.mxu0 0.0
      %1184 = vmatpush.msra.mxu0 0.0
      %1185 = vmatpush.msra.mxu0 0.0
      %1186 = vmatpush.msra.mxu0 0.0
      %1187 = vmatpush.msra.mxu0 0.0
      %1188 = vmatpush.msra.mxu0 0.0
      %1189 = vmatpush.msra.mxu0 0.0
      %1190 = vmatpush.msra.mxu0 %v1174
      %1191 = vmatpush.msra.mxu0 %v919
      %1192 = vmatmul.f32.gmra.mxu0 %v1168
      %v1193 = vpop.f32.mrf.mxu0
      %v1194 = vadd.f32 %v1072, %v1193
      %1195 = vmatmul.f32.gmra.mxu0 %v1171
      %v1196 = vpop.f32.mrf.mxu0
      %v1197 = vadd.f32 %v1075, %v1196
      %1198 = vmatmul.f32.gmra.mxu0 %v955
      %v1199 = vpop.f32.mrf.mxu0
      %v1200 = vadd.f32 %v1078, %v1199
      %1201 = vmatmul.f32.gmra.mxu0 %v958
      %v1202 = vpop.f32.mrf.mxu0
      %v1203 = vadd.f32 %v1081, %v1202
      %1204 = vmatmul.f32.gmra.mxu0 %v961
      %v1205 = vpop.f32.mrf.mxu0
      %v1206 = vadd.f32 %v1084, %v1205
      %1207 = vmatmul.f32.gmra.mxu0 %v964
      %v1208 = vpop.f32.mrf.mxu0
      %v1209 = vadd.f32 %v1087, %v1208
      %1210 = vmatmul.f32.gmra.mxu0 %v967
      %v1211 = vpop.f32.mrf.mxu0
      %v1212 = vadd.f32 %v1090, %v1211
      %1213 = vmatmul.f32.gmra.mxu0 %v970
      %v1214 = vpop.f32.mrf.mxu0
      %v1215 = vadd.f32 %v1093, %v1214
      %1216 = vmatmul.f32.gmra.mxu0 %v973
      %v1217 = vpop.f32.mrf.mxu0
      %v1218 = vadd.f32 %v1096, %v1217
      %1219 = vmatmul.f32.gmra.mxu0 %v976
      %v1220 = vpop.f32.mrf.mxu0
      %v1221 = vadd.f32 %v1099, %v1220
      %1222 = vmatmul.f32.gmra.mxu0 %v979
      %v1223 = vpop.f32.mrf.mxu0
      %v1224 = vadd.f32 %v1102, %v1223
      %1225 = vmatmul.f32.gmra.mxu0 %v982
      %v1226 = vpop.f32.mrf.mxu0
      %v1227 = vadd.f32 %v1105, %v1226
      %1228 = vmatmul.f32.gmra.mxu0 %v985
      %v1229 = vpop.f32.mrf.mxu0
      %v1230 = vadd.f32 %v1108, %v1229
      %1231 = vmatmul.f32.gmra.mxu0 %v988
      %v1232 = vpop.f32.mrf.mxu0
      %v1233 = vadd.f32 %v1111, %v1232
      %1234 = vmatmul.f32.gmra.mxu0 %v991
      %v1235 = vpop.f32.mrf.mxu0
      %v1236 = vadd.f32 %v1114, %v1235
      %1237 = vmatmul.f32.gmra.mxu0 %v994
      %v1238 = vpop.f32.mrf.mxu0
      %v1239 = vadd.f32 %v1117, %v1238
      %1240 = vmatmul.f32.gmra.mxu0 %v997
      %v1241 = vpop.f32.mrf.mxu0
      %v1242 = vadd.f32 %v1120, %v1241
      %1243 = vmatmul.f32.gmra.mxu0 %v1000
      %v1244 = vpop.f32.mrf.mxu0
      %v1245 = vadd.f32 %v1123, %v1244
      %1246 = vmatmul.f32.gmra.mxu0 %v1003
      %v1247 = vpop.f32.mrf.mxu0
      %v1248 = vadd.f32 %v1126, %v1247
      %1249 = vmatmul.f32.gmra.mxu0 %v1006
      %v1250 = vpop.f32.mrf.mxu0
      %v1251 = vadd.f32 %v1129, %v1250
      %1252 = vmatmul.f32.gmra.mxu0 %v1009
      %v1253 = vpop.f32.mrf.mxu0
      %v1254 = vadd.f32 %v1132, %v1253
      %1255 = vmatmul.f32.gmra.mxu0 %v1012
      %v1256 = vpop.f32.mrf.mxu0
      %v1257 = vadd.f32 %v1135, %v1256
      %1258 = vmatmul.f32.gmra.mxu0 %v1015
      %v1259 = vpop.f32.mrf.mxu0
      %v1260 = vadd.f32 %v1138, %v1259
      %1261 = vmatmul.f32.gmra.mxu0 %v1018
      %v1262 = vpop.f32.mrf.mxu0
      %v1263 = vadd.f32 %v1141, %v1262
      %1264 = vmatmul.f32.gmra.mxu0 %v1021
      %v1265 = vpop.f32.mrf.mxu0
      %v1266 = vadd.f32 %v1144, %v1265
      %1267 = vmatmul.f32.gmra.mxu0 %v1024
      %v1268 = vpop.f32.mrf.mxu0
      %v1269 = vadd.f32 %v1147, %v1268
      %1270 = vmatmul.f32.gmra.mxu0 %v1027
      %v1271 = vpop.f32.mrf.mxu0
      %v1272 = vadd.f32 %v1150, %v1271
      %1273 = vmatmul.f32.gmra.mxu0 %v1030
      %v1274 = vpop.f32.mrf.mxu0
      %v1275 = vadd.f32 %v1153, %v1274
      %1276 = vmatmul.f32.gmra.mxu0 %v1033
      %v1277 = vpop.f32.mrf.mxu0
      %v1278 = vadd.f32 %v1156, %v1277
      %1279 = vmatmul.f32.gmra.mxu0 %v1036
      %v1280 = vpop.f32.mrf.mxu0
      %v1281 = vadd.f32 %v1159, %v1280
      %1282 = vmatmul.f32.gmra.mxu0 %v1039
      %v1283 = vpop.f32.mrf.mxu0
      %v1284 = vadd.f32 %v1162, %v1283
      %1285 = vmatmul.f32.gmra.mxu0 %v1042
      %v1286 = vpop.f32.mrf.mxu0
      %v1287 = vadd.f32 %v1165, %v1286
      %1288 = vdwg.mxu0
      %v1292 = vrot.slane %v448, 1
      %v1293 = vrot.slane %v449, 1
      %v1294 = vsel %vm499, %v1292, %v1293
      %v1295 = vrot.slane %v450, 1
      %v1296 = vsel %vm499, %v1293, %v1295
      %1297 = vrot.lane.b32.xlu0 %v1294, 4
      %v1298 = vpop.permute.xlu0 %1297
      %1299 = vrot.lane.b32.xlu0 %v1296, 4
      %v1300 = vpop.permute.xlu0 %1299
      %v1303 = vrot.slane %v448, 2
      %v1304 = vrot.slane %v449, 2
      %v1305 = vsel %vm676, %v1303, %v1304
      %v1306 = vrot.slane %v450, 2
      %v1307 = vsel %vm676, %v1304, %v1306
      %1308 = vrot.lane.b32.xlu0 %v1305, 8
      %v1309 = vpop.permute.xlu0 %1308
      %1310 = vrot.lane.b32.xlu0 %v1307, 8
      %v1311 = vpop.permute.xlu0 %1310
      %v1314 = vsel %vm853, %v448, %v1298
      %v1315 = vsel %vm853, %v449, %v1300
      %v1316 = vsel %vm886, %v1314, %v1309
      %v1317 = vsel %vm886, %v1315, %v1311
      %s1318 = scalar_lea.vmem %s3, 32
      %v1319 = vld [vmem:[%s1318] sm:$0xff]
      %v1320 = vld [vmem:[%s1318 + $0x8] sm:$0xf]
      %v1322 = vsel %vm953, %v1316, 0
      %v1325 = vsel %vm953, %v1317, 0
      %v1328 = vsel %vm1050, %v1320, 0
      %1330 = vmatpush.msra.mxu0 0.0
      %1331 = vmatpush.msra.mxu0 0.0
      %1332 = vmatpush.msra.mxu0 0.0
      %1333 = vmatpush.msra.mxu0 0.0
      %1334 = vmatpush.msra.mxu0 0.0
      %1335 = vmatpush.msra.mxu0 0.0
      %1336 = vmatpush.msra.mxu0 0.0
      %1337 = vmatpush.msra.mxu0 0.0
      %1338 = vmatpush.msra.mxu0 0.0
      %1339 = vmatpush.msra.mxu0 0.0
      %1340 = vmatpush.msra.mxu0 0.0
      %1341 = vmatpush.msra.mxu0 0.0
      %1342 = vmatpush.msra.mxu0 0.0
      %1343 = vmatpush.msra.mxu0 0.0
      %1344 = vmatpush.msra.mxu0 %v1328
      %1345 = vmatpush.msra.mxu0 %v1319
      %1346 = vmatmul.f32.gmra.mxu0 %v961
      %v1347 = vpop.f32.mrf.mxu0
      %v1348 = vadd.f32 0.0, %v1347
      %1349 = vmatmul.f32.gmra.mxu0 %v964
      %v1350 = vpop.f32.mrf.mxu0
      %v1351 = vadd.f32 0.0, %v1350
      %1352 = vmatmul.f32.gmra.mxu0 %v967
      %v1353 = vpop.f32.mrf.mxu0
      %v1354 = vadd.f32 0.0, %v1353
      %1355 = vmatmul.f32.gmra.mxu0 %v970
      %v1356 = vpop.f32.mrf.mxu0
      %v1357 = vadd.f32 0.0, %v1356
      %1358 = vmatmul.f32.gmra.mxu0 %v973
      %v1359 = vpop.f32.mrf.mxu0
      %v1360 = vadd.f32 0.0, %v1359
      %1361 = vmatmul.f32.gmra.mxu0 %v976
      %v1362 = vpop.f32.mrf.mxu0
      %v1363 = vadd.f32 0.0, %v1362
      %1364 = vmatmul.f32.gmra.mxu0 %v979
      %v1365 = vpop.f32.mrf.mxu0
      %v1366 = vadd.f32 0.0, %v1365
      %1367 = vmatmul.f32.gmra.mxu0 %v982
      %v1368 = vpop.f32.mrf.mxu0
      %v1369 = vadd.f32 0.0, %v1368
      %1370 = vmatmul.f32.gmra.mxu0 %v985
      %v1371 = vpop.f32.mrf.mxu0
      %v1372 = vadd.f32 0.0, %v1371
      %1373 = vmatmul.f32.gmra.mxu0 %v988
      %v1374 = vpop.f32.mrf.mxu0
      %v1375 = vadd.f32 0.0, %v1374
      %1376 = vmatmul.f32.gmra.mxu0 %v991
      %v1377 = vpop.f32.mrf.mxu0
      %v1378 = vadd.f32 0.0, %v1377
      %1379 = vmatmul.f32.gmra.mxu0 %v994
      %v1380 = vpop.f32.mrf.mxu0
      %v1381 = vadd.f32 0.0, %v1380
      %1382 = vmatmul.f32.gmra.mxu0 %v997
      %v1383 = vpop.f32.mrf.mxu0
      %v1384 = vadd.f32 0.0, %v1383
      %1385 = vmatmul.f32.gmra.mxu0 %v1000
      %v1386 = vpop.f32.mrf.mxu0
      %v1387 = vadd.f32 0.0, %v1386
      %1388 = vmatmul.f32.gmra.mxu0 %v1003
      %v1389 = vpop.f32.mrf.mxu0
      %v1390 = vadd.f32 0.0, %v1389
      %1391 = vmatmul.f32.gmra.mxu0 %v1006
      %v1392 = vpop.f32.mrf.mxu0
      %v1393 = vadd.f32 0.0, %v1392
      %1394 = vmatmul.f32.gmra.mxu0 %v1009
      %v1395 = vpop.f32.mrf.mxu0
      %v1396 = vadd.f32 0.0, %v1395
      %1397 = vmatmul.f32.gmra.mxu0 %v1012
      %v1398 = vpop.f32.mrf.mxu0
      %v1399 = vadd.f32 0.0, %v1398
      %1400 = vmatmul.f32.gmra.mxu0 %v1015
      %v1401 = vpop.f32.mrf.mxu0
      %v1402 = vadd.f32 0.0, %v1401
      %1403 = vmatmul.f32.gmra.mxu0 %v1018
      %v1404 = vpop.f32.mrf.mxu0
      %v1405 = vadd.f32 0.0, %v1404
      %1406 = vmatmul.f32.gmra.mxu0 %v1021
      %v1407 = vpop.f32.mrf.mxu0
      %v1408 = vadd.f32 0.0, %v1407
      %1409 = vmatmul.f32.gmra.mxu0 %v1024
      %v1410 = vpop.f32.mrf.mxu0
      %v1411 = vadd.f32 0.0, %v1410
      %1412 = vmatmul.f32.gmra.mxu0 %v1027
      %v1413 = vpop.f32.mrf.mxu0
      %v1414 = vadd.f32 0.0, %v1413
      %1415 = vmatmul.f32.gmra.mxu0 %v1030
      %v1416 = vpop.f32.mrf.mxu0
      %v1417 = vadd.f32 0.0, %v1416
      %1418 = vmatmul.f32.gmra.mxu0 %v1033
      %v1419 = vpop.f32.mrf.mxu0
      %v1420 = vadd.f32 0.0, %v1419
      %1421 = vmatmul.f32.gmra.mxu0 %v1036
      %v1422 = vpop.f32.mrf.mxu0
      %v1423 = vadd.f32 0.0, %v1422
      %1424 = vmatmul.f32.gmra.mxu0 %v1039
      %v1425 = vpop.f32.mrf.mxu0
      %v1426 = vadd.f32 0.0, %v1425
      %1427 = vmatmul.f32.gmra.mxu0 %v1042
      %v1428 = vpop.f32.mrf.mxu0
      %v1429 = vadd.f32 0.0, %v1428
      %1430 = vmatmul.f32.gmra.mxu0 %v1045
      %v1431 = vpop.f32.mrf.mxu0
      %v1432 = vadd.f32 0.0, %v1431
      %1433 = vmatmul.f32.gmra.mxu0 %v1048
      %v1434 = vpop.f32.mrf.mxu0
      %v1435 = vadd.f32 0.0, %v1434
      %1436 = vmatmul.f32.gmra.mxu0 %v1322
      %v1437 = vpop.f32.mrf.mxu0
      %v1438 = vadd.f32 0.0, %v1437
      %1439 = vmatmul.f32.gmra.mxu0 %v1325
      %v1440 = vpop.f32.mrf.mxu0
      %v1441 = vadd.f32 0.0, %v1440
      %1442 = vdwg.mxu0
      %v1443 = vadd.f32 %v1194, %v1348
      %v1444 = vadd.f32 %v1197, %v1351
      %v1445 = vadd.f32 %v1200, %v1354
      %v1446 = vadd.f32 %v1203, %v1357
      %v1447 = vadd.f32 %v1206, %v1360
      %v1448 = vadd.f32 %v1209, %v1363
      %v1449 = vadd.f32 %v1212, %v1366
      %v1450 = vadd.f32 %v1215, %v1369
      %v1451 = vadd.f32 %v1218, %v1372
      %v1452 = vadd.f32 %v1221, %v1375
      %v1453 = vadd.f32 %v1224, %v1378
      %v1454 = vadd.f32 %v1227, %v1381
      %v1455 = vadd.f32 %v1230, %v1384
      %v1456 = vadd.f32 %v1233, %v1387
      %v1457 = vadd.f32 %v1236, %v1390
      %v1458 = vadd.f32 %v1239, %v1393
      %v1459 = vadd.f32 %v1242, %v1396
      %v1460 = vadd.f32 %v1245, %v1399
      %v1461 = vadd.f32 %v1248, %v1402
      %v1462 = vadd.f32 %v1251, %v1405
      %v1463 = vadd.f32 %v1254, %v1408
      %v1464 = vadd.f32 %v1257, %v1411
      %v1465 = vadd.f32 %v1260, %v1414
      %v1466 = vadd.f32 %v1263, %v1417
      %v1467 = vadd.f32 %v1266, %v1420
      %v1468 = vadd.f32 %v1269, %v1423
      %v1469 = vadd.f32 %v1272, %v1426
      %v1470 = vadd.f32 %v1275, %v1429
      %v1471 = vadd.f32 %v1278, %v1432
      %v1472 = vadd.f32 %v1281, %v1435
      %v1473 = vadd.f32 %v1284, %v1438
      %v1474 = vadd.f32 %v1287, %v1441
      %v1475 = vld [vmem:[%s4] sm:$0x1]
      %v1477 = vperm.slane %v1475, 0
      %v1479 = vadd.f32 %v1443, %v1477
      %v1480 = vadd.f32 %v1444, %v1477
      %v1481 = vadd.f32 %v1445, %v1477
      %v1482 = vadd.f32 %v1446, %v1477
      %v1483 = vadd.f32 %v1447, %v1477
      %v1484 = vadd.f32 %v1448, %v1477
      %v1485 = vadd.f32 %v1449, %v1477
      %v1486 = vadd.f32 %v1450, %v1477
      %v1487 = vadd.f32 %v1451, %v1477
      %v1488 = vadd.f32 %v1452, %v1477
      %v1489 = vadd.f32 %v1453, %v1477
      %v1490 = vadd.f32 %v1454, %v1477
      %v1491 = vadd.f32 %v1455, %v1477
      %v1492 = vadd.f32 %v1456, %v1477
      %v1493 = vadd.f32 %v1457, %v1477
      %v1494 = vadd.f32 %v1458, %v1477
      %v1495 = vadd.f32 %v1459, %v1477
      %v1496 = vadd.f32 %v1460, %v1477
      %v1497 = vadd.f32 %v1461, %v1477
      %v1498 = vadd.f32 %v1462, %v1477
      %v1499 = vadd.f32 %v1463, %v1477
      %v1500 = vadd.f32 %v1464, %v1477
      %v1501 = vadd.f32 %v1465, %v1477
      %v1502 = vadd.f32 %v1466, %v1477
      %v1503 = vadd.f32 %v1467, %v1477
      %v1504 = vadd.f32 %v1468, %v1477
      %v1505 = vadd.f32 %v1469, %v1477
      %v1506 = vadd.f32 %v1470, %v1477
      %v1507 = vadd.f32 %v1471, %v1477
      %v1508 = vadd.f32 %v1472, %v1477
      %v1509 = vadd.f32 %v1473, %v1477
      %v1510 = vadd.f32 %v1474, %v1477
      %1511 = vst.msk [vmem:[%s395] sm:$0xff] %vm886, %v1479
      %1512 = vst.msk [vmem:[%s395 + $0x8] sm:$0xff] %vm886, %v1480
      %1513 = vst.msk [vmem:[%s395 + $0x20] sm:$0xff] %vm886, %v1481
      %1514 = vst.msk [vmem:[%s395 + $0x28] sm:$0xff] %vm886, %v1482
      %1515 = vst.msk [vmem:[%s395 + $0x40] sm:$0xff] %vm886, %v1483
      %1516 = vst.msk [vmem:[%s395 + $0x48] sm:$0xff] %vm886, %v1484
      %1517 = vst.msk [vmem:[%s395 + $0x60] sm:$0xff] %vm886, %v1485
      %1518 = vst.msk [vmem:[%s395 + $0x68] sm:$0xff] %vm886, %v1486
      %1519 = vst.msk [vmem:[%s395 + $0x80] sm:$0xff] %vm886, %v1487
      %1520 = vst.msk [vmem:[%s395 + $0x88] sm:$0xff] %vm886, %v1488
      %1521 = vst.msk [vmem:[%s395 + $0xa0] sm:$0xff] %vm886, %v1489
      %1522 = vst.msk [vmem:[%s395 + $0xa8] sm:$0xff] %vm886, %v1490
      %1523 = vst.msk [vmem:[%s395 + $0xc0] sm:$0xff] %vm886, %v1491
      %1524 = vst.msk [vmem:[%s395 + $0xc8] sm:$0xff] %vm886, %v1492
      %1525 = vst.msk [vmem:[%s395 + $0xe0] sm:$0xff] %vm886, %v1493
      %1526 = vst.msk [vmem:[%s395 + $0xe8] sm:$0xff] %vm886, %v1494
      %1527 = vst.msk [vmem:[%s395 + $0x100] sm:$0xff] %vm886, %v1495
      %1528 = vst.msk [vmem:[%s395 + $0x108] sm:$0xff] %vm886, %v1496
      %1529 = vst.msk [vmem:[%s395 + $0x120] sm:$0xff] %vm886, %v1497
      %1530 = vst.msk [vmem:[%s395 + $0x128] sm:$0xff] %vm886, %v1498
      %1531 = vst.msk [vmem:[%s395 + $0x140] sm:$0xff] %vm886, %v1499
      %1532 = vst.msk [vmem:[%s395 + $0x148] sm:$0xff] %vm886, %v1500
      %1533 = vst.msk [vmem:[%s395 + $0x160] sm:$0xff] %vm886, %v1501
      %1534 = vst.msk [vmem:[%s395 + $0x168] sm:$0xff] %vm886, %v1502
      %1535 = vst.msk [vmem:[%s395 + $0x180] sm:$0xff] %vm886, %v1503
      %1536 = vst.msk [vmem:[%s395 + $0x188] sm:$0xff] %vm886, %v1504
      %1537 = vst.msk [vmem:[%s395 + $0x1a0] sm:$0xff] %vm886, %v1505
      %1538 = vst.msk [vmem:[%s395 + $0x1a8] sm:$0xff] %vm886, %v1506
      %1539 = vst.msk [vmem:[%s395 + $0x1c0] sm:$0xff] %vm886, %v1507
      %1540 = vst.msk [vmem:[%s395 + $0x1c8] sm:$0xff] %vm886, %v1508
      %1541 = vst.msk [vmem:[%s395 + $0x1e0] sm:$0xff] %vm886, %v1509
      %1542 = vst.msk [vmem:[%s395 + $0x1e8] sm:$0xff] %vm886, %v1510
      %1575 = vrot.lane.b32.xlu0 %v1479, 120
      %v1576 = vpop.permute.xlu0 %1575
      %1577 = vrot.lane.b32.xlu0 %v1480, 120
      %v1578 = vpop.permute.xlu0 %1577
      %1579 = vrot.lane.b32.xlu0 %v1481, 120
      %v1580 = vpop.permute.xlu0 %1579
      %1581 = vrot.lane.b32.xlu0 %v1482, 120
      %v1582 = vpop.permute.xlu0 %1581
      %1583 = vrot.lane.b32.xlu0 %v1483, 120
      %v1584 = vpop.permute.xlu0 %1583
      %1585 = vrot.lane.b32.xlu0 %v1484, 120
      %v1586 = vpop.permute.xlu0 %1585
      %1587 = vrot.lane.b32.xlu0 %v1485, 120
      %v1588 = vpop.permute.xlu0 %1587
      %1589 = vrot.lane.b32.xlu0 %v1486, 120
      %v1590 = vpop.permute.xlu0 %1589
      %1591 = vrot.lane.b32.xlu0 %v1487, 120
      %v1592 = vpop.permute.xlu0 %1591
      %1593 = vrot.lane.b32.xlu0 %v1488, 120
      %v1594 = vpop.permute.xlu0 %1593
      %1595 = vrot.lane.b32.xlu0 %v1489, 120
      %v1596 = vpop.permute.xlu0 %1595
      %1597 = vrot.lane.b32.xlu0 %v1490, 120
      %v1598 = vpop.permute.xlu0 %1597
      %1599 = vrot.lane.b32.xlu0 %v1491, 120
      %v1600 = vpop.permute.xlu0 %1599
      %1601 = vrot.lane.b32.xlu0 %v1492, 120
      %v1602 = vpop.permute.xlu0 %1601
      %1603 = vrot.lane.b32.xlu0 %v1493, 120
      %v1604 = vpop.permute.xlu0 %1603
      %1605 = vrot.lane.b32.xlu0 %v1494, 120
      %v1606 = vpop.permute.xlu0 %1605
      %1607 = vrot.lane.b32.xlu0 %v1495, 120
      %v1608 = vpop.permute.xlu0 %1607
      %1609 = vrot.lane.b32.xlu0 %v1496, 120
      %v1610 = vpop.permute.xlu0 %1609
      %1611 = vrot.lane.b32.xlu0 %v1497, 120
      %v1612 = vpop.permute.xlu0 %1611
      %1613 = vrot.lane.b32.xlu0 %v1498, 120
      %v1614 = vpop.permute.xlu0 %1613
      %1615 = vrot.lane.b32.xlu0 %v1499, 120
      %v1616 = vpop.permute.xlu0 %1615
      %1617 = vrot.lane.b32.xlu0 %v1500, 120
      %v1618 = vpop.permute.xlu0 %1617
      %1619 = vrot.lane.b32.xlu0 %v1501, 120
      %v1620 = vpop.permute.xlu0 %1619
      %1621 = vrot.lane.b32.xlu0 %v1502, 120
      %v1622 = vpop.permute.xlu0 %1621
      %1623 = vrot.lane.b32.xlu0 %v1503, 120
      %v1624 = vpop.permute.xlu0 %1623
      %1625 = vrot.lane.b32.xlu0 %v1504, 120
      %v1626 = vpop.permute.xlu0 %1625
      %1627 = vrot.lane.b32.xlu0 %v1505, 120
      %v1628 = vpop.permute.xlu0 %1627
      %1629 = vrot.lane.b32.xlu0 %v1506, 120
      %v1630 = vpop.permute.xlu0 %1629
      %1631 = vrot.lane.b32.xlu0 %v1507, 120
      %v1632 = vpop.permute.xlu0 %1631
      %1633 = vrot.lane.b32.xlu0 %v1508, 120
      %v1634 = vpop.permute.xlu0 %1633
      %1635 = vrot.lane.b32.xlu0 %v1509, 120
      %v1636 = vpop.permute.xlu0 %1635
      %1637 = vrot.lane.b32.xlu0 %v1510, 120
      %v1638 = vpop.permute.xlu0 %1637
      %s1671 = scalar_lea.vmem %s395, 16
      %1672 = vst.msk [vmem:[%s1671] sm:$0xff] %vm886, %v1576
      %1673 = vst.msk [vmem:[%s1671 + $0x8] sm:$0xff] %vm886, %v1578
      %1674 = vst.msk [vmem:[%s1671 + $0x20] sm:$0xff] %vm886, %v1580
      %1675 = vst.msk [vmem:[%s1671 + $0x28] sm:$0xff] %vm886, %v1582
      %1676 = vst.msk [vmem:[%s1671 + $0x40] sm:$0xff] %vm886, %v1584
      %1677 = vst.msk [vmem:[%s1671 + $0x48] sm:$0xff] %vm886, %v1586
      %1678 = vst.msk [vmem:[%s1671 + $0x60] sm:$0xff] %vm886, %v1588
      %1679 = vst.msk [vmem:[%s1671 + $0x68] sm:$0xff] %vm886, %v1590
      %1680 = vst.msk [vmem:[%s1671 + $0x80] sm:$0xff] %vm886, %v1592
      %1681 = vst.msk [vmem:[%s1671 + $0x88] sm:$0xff] %vm886, %v1594
      %1682 = vst.msk [vmem:[%s1671 + $0xa0] sm:$0xff] %vm886, %v1596
      %1683 = vst.msk [vmem:[%s1671 + $0xa8] sm:$0xff] %vm886, %v1598
      %1684 = vst.msk [vmem:[%s1671 + $0xc0] sm:$0xff] %vm886, %v1600
      %1685 = vst.msk [vmem:[%s1671 + $0xc8] sm:$0xff] %vm886, %v1602
      %1686 = vst.msk [vmem:[%s1671 + $0xe0] sm:$0xff] %vm886, %v1604
      %1687 = vst.msk [vmem:[%s1671 + $0xe8] sm:$0xff] %vm886, %v1606
      %1688 = vst.msk [vmem:[%s1671 + $0x100] sm:$0xff] %vm886, %v1608
      %1689 = vst.msk [vmem:[%s1671 + $0x108] sm:$0xff] %vm886, %v1610
      %1690 = vst.msk [vmem:[%s1671 + $0x120] sm:$0xff] %vm886, %v1612
      %1691 = vst.msk [vmem:[%s1671 + $0x128] sm:$0xff] %vm886, %v1614
      %1692 = vst.msk [vmem:[%s1671 + $0x140] sm:$0xff] %vm886, %v1616
      %1693 = vst.msk [vmem:[%s1671 + $0x148] sm:$0xff] %vm886, %v1618
      %1694 = vst.msk [vmem:[%s1671 + $0x160] sm:$0xff] %vm886, %v1620
      %1695 = vst.msk [vmem:[%s1671 + $0x168] sm:$0xff] %vm886, %v1622
      %1696 = vst.msk [vmem:[%s1671 + $0x180] sm:$0xff] %vm886, %v1624
      %1697 = vst.msk [vmem:[%s1671 + $0x188] sm:$0xff] %vm886, %v1626
      %1698 = vst.msk [vmem:[%s1671 + $0x1a0] sm:$0xff] %vm886, %v1628
      %1699 = vst.msk [vmem:[%s1671 + $0x1a8] sm:$0xff] %vm886, %v1630
      %1700 = vst.msk [vmem:[%s1671 + $0x1c0] sm:$0xff] %vm886, %v1632
      %1701 = vst.msk [vmem:[%s1671 + $0x1c8] sm:$0xff] %vm886, %v1634
      %1702 = vst.msk [vmem:[%s1671 + $0x1e0] sm:$0xff] %vm886, %v1636
      %1703 = vst.msk [vmem:[%s1671 + $0x1e8] sm:$0xff] %vm886, %v1638
      %s1704 = smul.u32 16, %s21
      %p1705 = scmp.lt.s32.totalorder %s20, 1
      %s1706 = scalar_select %p1705, %s20, 1
      %p1707 = scmp.lt.s32.totalorder %s1704, 15
      %s1708 = scalar_select %p1707, %s1704, 15
      %s1709 = smul.addr %s1708, 4
      %s1710 = smul.addr %s1706, 64
      %s1711 = sadd.s32 %s1709, %s1710
      %s1712 = smul.addr %s1711, 8
      %s1713 = scalar_lea.vmem %s5, %s1712
      // Predicated region
      $region41: #{sr_upsampling.1} parent=39 // pred_check
        %p1714 = pneg %p184
      $region42: #{sr_upsampling.1} parent=39 // pred_check_branch
        %1716 = sbr.rel (%p1714) target = $region44
      $region43: #{sr_upsampling.1} parent=39 // pred_region
        %s1717 = smul.u32 16, %s21
      $region44: #{sr_upsampling.1} parent=39 // pred_fallthru
        _
    $region40: #{sr_upsampling.1} parent=5 // pred_fallthru
      _
    %p1718 = scmp.le.s32.totalorder 2, %s11
    // Predicated region
    $region45: #{sr_upsampling.1} parent=5 // pred_check
      %p1719 = pneg %p1718
    $region46: #{sr_upsampling.1} parent=5 // pred_check_branch
      %1721 = sbr.rel (%p1719) target = $region48
    $region47: #{sr_upsampling.1} parent=5 // pred_region
      %s1722 = ssub.s32 %s11, 2
      // Predicated region
      $region49: #{sr_upsampling.1} parent=47 // pred_check
        %p1723 = pneg %p190
      $region50: #{sr_upsampling.1} parent=47 // pred_check_branch
        %1725 = sbr.rel (%p1723) target = $region52
      $region51: #{sr_upsampling.1} parent=47 // pred_region
        %s1726 = smul.u32 16, %s23
        %p1727 = scmp.lt.s32.totalorder %s22, 1
        %s1728 = scalar_select %p1727, %s22, 1
        %p1729 = scmp.lt.s32.totalorder %s1726, 15
        %s1730 = scalar_select %p1729, %s1726, 15
        %s1731 = smul.addr %s1730, 4
        %s1732 = smul.addr %s1728, 64
        %s1733 = sadd.s32 %s1731, %s1732
        %s1734 = smul.addr %s1733, 8
        %s1735 = scalar_lea.vmem %s5, %s1734
      $region52: #{sr_upsampling.1} parent=47 // pred_fallthru
        _
    $region48: #{sr_upsampling.1} parent=5 // pred_fallthru
      _
  $region6: #{sr_upsampling.1} parent=0 // loop_footer
    %s15 = sadd.s32 1, %s11
  $region7: #{sr_upsampling.1} parent=0 // loop_footer_branch
    %10 = sbr.rel target = $region3
  $region8: #{sr_upsampling.1} parent=0 // loop_exit
    _

</llo_original>
